<compile_context>
chip_gen: v5e
topology: v5e:2x2
jax: 0.10.0
libtpu: 0.0.40
codegen_flags: <defaults>
</compile_context>

<pallas_src>
import functools

import jax
import jax.numpy as jnp
from jax import lax
from jax.experimental import pallas as pl
from jax.experimental.pallas import tpu as pltpu


def _fused_conv_no_pool_kernel(x_ref, w1_ref, b1_ref, w2_ref, b2_ref, m_ref,
                               o_ref, *, W):
    """Two fused Conv3x3(+folded BN)+ReLU blocks for one batch element.

    x_ref:  (1, Cin, H*W)  channel-first, lane-dense input tile
    w1_ref: (9, C1, Cin)   per-tap weights, BN1 scale folded in
    b1_ref: (C1, 1)        folded bias (conv bias + BN shift)
    w2_ref: (9, C2, C1)    per-tap weights, BN2 scale folded in
    b2_ref: (C2, 1)        folded bias
    m_ref:  (9, 1, H*W)    multiplicative border masks (1.0 valid / 0.0 pad)
    o_ref:  (1, C2, H*W)   channel-first, lane-dense output tile
    """
    HW = x_ref.shape[2]

    def conv3x3_bn_relu(x_cf, w_ref, b_ref):
        c_out = w_ref.shape[1]
        acc = jnp.zeros((c_out, HW), jnp.float32)
        for dy in range(3):
            for dx in range(3):
                t = dy * 3 + dx
                # result[f] = x[f + (dy-1)*W + (dx-1)]  (circular; wrap killed
                # by the border mask below).
                shift = ((1 - dy) * W + (1 - dx)) % HW
                xs = pltpu.roll(x_cf, shift=shift, axis=1) if shift else x_cf
                if not (dy == 1 and dx == 1):          # center tap: no mask
                    xs = xs * m_ref[t]                  # (1,HW) bcast on sublanes
                acc = acc + jnp.dot(w_ref[t], xs,
                                    preferred_element_type=jnp.float32)
        return jnp.maximum(acc + b_ref[...], 0.0)

    y1 = conv3x3_bn_relu(x_ref[0], w1_ref, b1_ref)      # (C1, HW), stays in VMEM
    y2 = conv3x3_bn_relu(y1, w2_ref, b2_ref)            # (C2, HW)
    o_ref[0] = y2.astype(o_ref.dtype)


def _make_tap_masks(H, W):
    """(9, 1, H*W) float masks: 1.0 where the tap's source pixel is in-bounds."""
    f = jnp.arange(H * W, dtype=jnp.int32)
    row = f // W
    col = f % W
    masks = []
    for dy in range(3):
        for dx in range(3):
            ok = jnp.ones((H * W,), jnp.bool_)
            if dy == 0:
                ok = ok & (row >= 1)
            if dy == 2:
                ok = ok & (row <= H - 2)
            if dx == 0:
                ok = ok & (col >= 1)
            if dx == 2:
                ok = ok & (col <= W - 2)
            masks.append(ok)
    return jnp.stack(masks).astype(jnp.float32).reshape(9, 1, H * W)


def conv_no_pool(x_nchw, block1, block2):
    """ConvNoPool forward. x_nchw: (N, Cin, H, W) -> (N, C2, H, W)."""
    w1, b1 = block1              # (9, C1, Cin), (C1, 1)
    w2, b2 = block2              # (9, C2, C1),  (C2, 1)
    N, Cin, H, W = x_nchw.shape
    C1 = w1.shape[1]
    C2 = w2.shape[1]
    HW = H * W

    x_flat = x_nchw.reshape(N, Cin, HW)          # free reshape, no HBM transpose
    masks = _make_tap_masks(H, W)                # tiny, computed once outside

    kernel = functools.partial(_fused_conv_no_pool_kernel, W=W)

    out = pl.pallas_call(
        kernel,
        out_shape=jax.ShapeDtypeStruct((N, C2, HW), jnp.float32),
        grid_spec=pltpu.PrefetchScalarGridSpec(
            num_scalar_prefetch=0,
            grid=(N,),
            in_specs=[
                pl.BlockSpec((1, Cin, HW), lambda n: (n, 0, 0)),
                pl.BlockSpec((9, C1, Cin), lambda n: (0, 0, 0)),
                pl.BlockSpec((C1, 1), lambda n: (0, 0)),
                pl.BlockSpec((9, C2, C1), lambda n: (0, 0, 0)),
                pl.BlockSpec((C2, 1), lambda n: (0, 0)),
                pl.BlockSpec((9, 1, HW), lambda n: (0, 0, 0)),
            ],
            out_specs=pl.BlockSpec((1, C2, HW), lambda n: (n, 0, 0)),
        ),
        compiler_params=pltpu.CompilerParams(
            dimension_semantics=("parallel",)),
    )(x_flat, w1, b1, w2, b2, masks)

    # Output is already channel-first (N, C2, H*W); reshape is free.
    return out.reshape(N, C2, H, W)


def _make_raw_block_params(key, in_ch, out_ch):
    """Deterministic raw params for one ConvBNReLU block."""
    k_w, k_b, k_g, k_be, k_m, k_v = jax.random.split(key, 6)
    w = jax.random.normal(k_w, (3, 3, in_ch, out_ch), jnp.float32) * 0.1   # HWIO
    b_conv = jax.random.normal(k_b, (out_ch,), jnp.float32) * 0.1
    gamma = 1.0 + 0.1 * jax.random.normal(k_g, (out_ch,), jnp.float32)
    beta = 0.1 * jax.random.normal(k_be, (out_ch,), jnp.float32)
    run_mean = 0.1 * jax.random.normal(k_m, (out_ch,), jnp.float32)
    run_var = 1.0 + 0.1 * jax.random.uniform(k_v, (out_ch,), jnp.float32)
    return w, b_conv, gamma, beta, run_mean, run_var


def fold_block_params(w_hwio, b_conv, gamma, beta, mean, var, eps=1e-5):
    """Fold eval-mode BN into the conv; emit per-tap (9, Cout, Cin) weights."""
    in_ch, out_ch = w_hwio.shape[2], w_hwio.shape[3]
    scale = gamma * lax.rsqrt(var + eps)                        # (Cout,)
    w_taps = jnp.transpose(w_hwio.reshape(9, in_ch, out_ch), (0, 2, 1))
    w_taps = w_taps * scale[None, :, None]                      # (9, Cout, Cin)
    bias = (beta + (b_conv - mean) * scale).reshape(out_ch, 1)  # (Cout, 1)
    return w_taps, bias


def _reference_block_nchw(x, w_hwio, b_conv, gamma, beta, mean, var, eps=1e-5):
    y = lax.conv_general_dilated(
        x, w_hwio, window_strides=(1, 1), padding='SAME',
        dimension_numbers=('NCHW', 'HWIO', 'NCHW'),
        precision=lax.Precision.HIGHEST)
    y = y + b_conv[None, :, None, None]
    scale = gamma * lax.rsqrt(var + eps)
    y = (y - mean[None, :, None, None]) * scale[None, :, None, None] \
        + beta[None, :, None, None]
    return jnp.maximum(y, 0.0)


if __name__ == "__main__":
    key = jax.random.PRNGKey(0)
    k_x, k_p1, k_p2 = jax.random.split(key, 3)

    N, in_ch, out_ch, S = 2, 4, 8, 16
    x = jax.random.normal(k_x, (N, in_ch, S, S), jnp.float32)   # NCHW like PyTorch

    raw1 = _make_raw_block_params(k_p1, in_ch, out_ch)
    raw2 = _make_raw_block_params(k_p2, out_ch, out_ch)
    blk1 = fold_block_params(*raw1)
    blk2 = fold_block_params(*raw2)

    out = jax.jit(conv_no_pool)(x, blk1, blk2)
    out = jax.block_until_ready(out)

    # Cross-check against a plain-JAX reference of the same math (eval-mode BN,
    # HIGHEST-precision conv).  Kernel matmuls use default MXU precision, so
    # the tolerance is set to comfortably cover that (consciously accepted).
    ref = _reference_block_nchw(x, *raw1)
    ref = _reference_block_nchw(ref, *raw2)

    assert out.shape == (N, out_ch, S, S)
    max_err = float(jnp.max(jnp.abs(out - ref)))
    assert jnp.allclose(out, ref, atol=2e-3, rtol=2e-3), max_err

    print("KERNEL_OK")
</pallas_src>

<mosaic_0001>
module attributes {stable_mosaic.version = 11 : i64} {
  func.func @_fused_conv_no_pool_kernel(%arg0: i32, %arg1: memref<1x4x256xf32, #tpu.memory_space<vmem>>, %arg2: memref<9x8x4xf32, #tpu.memory_space<vmem>>, %arg3: memref<8x1xf32, #tpu.memory_space<vmem>>, %arg4: memref<9x8x8xf32, #tpu.memory_space<vmem>>, %arg5: memref<8x1xf32, #tpu.memory_space<vmem>>, %arg6: memref<9x1x256xf32, #tpu.memory_space<vmem>>, %arg7: memref<1x8x256xf32, #tpu.memory_space<vmem>>) attributes {dimension_semantics = [#tpu.dimension_semantics<parallel>], iteration_bounds = array<i64: 2>, scalar_prefetch = 0 : i64, scratch_operands = 0 : i64, tpu.core_type = #tpu.core_type<tc>, window_params = [{transform_indices = @transform_0, window_bounds = array<i64: 1, 4, 256>}, {pipeline_mode = #tpu.pipeline_mode<synchronous>, transform_indices = @transform_1, window_bounds = array<i64: 9, 8, 4>}, {pipeline_mode = #tpu.pipeline_mode<synchronous>, transform_indices = @transform_2, window_bounds = array<i64: 8, 1>}, {pipeline_mode = #tpu.pipeline_mode<synchronous>, transform_indices = @transform_3, window_bounds = array<i64: 9, 8, 8>}, {pipeline_mode = #tpu.pipeline_mode<synchronous>, transform_indices = @transform_4, window_bounds = array<i64: 8, 1>}, {pipeline_mode = #tpu.pipeline_mode<synchronous>, transform_indices = @transform_5, window_bounds = array<i64: 9, 1, 256>}, {transform_indices = @transform_6, window_bounds = array<i64: 1, 8, 256>}]} {
    %c0 = arith.constant 0 : index
    %c0_0 = arith.constant 0 : index
    %c0_1 = arith.constant 0 : index
    %0 = vector.load %arg1[%c0, %c0_0, %c0_1] : memref<1x4x256xf32, #tpu.memory_space<vmem>>, vector<1x4x256xf32>
    %1 = vector.shape_cast %0 : vector<1x4x256xf32> to vector<4x256xf32>
    %cst = arith.constant 0.000000e+00 : f32
    %2 = vector.broadcast %cst : f32 to vector<8x256xf32>
    %c17_i32 = arith.constant 17 : i32
    %3 = tpu.dynamic_rotate %1 by %c17_i32 dim 1 : vector<4x256xf32>, i32 -> vector<4x256xf32>
    %c0_2 = arith.constant 0 : index
    %c0_3 = arith.constant 0 : index
    %c0_4 = arith.constant 0 : index
    %4 = vector.load %arg6[%c0_2, %c0_3, %c0_4] : memref<9x1x256xf32, #tpu.memory_space<vmem>>, vector<1x1x256xf32>
    %5 = vector.shape_cast %4 : vector<1x1x256xf32> to vector<1x256xf32>
    %6 = vector.broadcast %5 : vector<1x256xf32> to vector<4x256xf32>
    %7 = arith.mulf %3, %6 : vector<4x256xf32>
    %c0_5 = arith.constant 0 : index
    %c0_6 = arith.constant 0 : index
    %c0_7 = arith.constant 0 : index
    %8 = vector.load %arg2[%c0_5, %c0_6, %c0_7] : memref<9x8x4xf32, #tpu.memory_space<vmem>>, vector<1x8x4xf32>
    %9 = vector.shape_cast %8 : vector<1x8x4xf32> to vector<8x4xf32>
    %cst_8 = arith.constant dense<0.000000e+00> : vector<8x256xf32>
    %10 = tpu.matmul %9, %7, %cst_8 {dimension_numbers = #tpu.dot_dimension_numbers<[1], [0], [0], [1], [0, 0, 1, 1], [], []>} : vector<8x4xf32>, vector<4x256xf32>, vector<8x256xf32> -> vector<8x256xf32>
    %11 = arith.addf %2, %10 : vector<8x256xf32>
    %c16_i32 = arith.constant 16 : i32
    %12 = tpu.dynamic_rotate %1 by %c16_i32 dim 1 : vector<4x256xf32>, i32 -> vector<4x256xf32>
    %c1 = arith.constant 1 : index
    %c0_9 = arith.constant 0 : index
    %c0_10 = arith.constant 0 : index
    %13 = vector.load %arg6[%c1, %c0_9, %c0_10] : memref<9x1x256xf32, #tpu.memory_space<vmem>>, vector<1x1x256xf32>
    %14 = vector.shape_cast %13 : vector<1x1x256xf32> to vector<1x256xf32>
    %15 = vector.broadcast %14 : vector<1x256xf32> to vector<4x256xf32>
    %16 = arith.mulf %12, %15 : vector<4x256xf32>
    %c1_11 = arith.constant 1 : index
    %c0_12 = arith.constant 0 : index
    %c0_13 = arith.constant 0 : index
    %17 = vector.load %arg2[%c1_11, %c0_12, %c0_13] : memref<9x8x4xf32, #tpu.memory_space<vmem>>, vector<1x8x4xf32>
    %18 = vector.shape_cast %17 : vector<1x8x4xf32> to vector<8x4xf32>
    %cst_14 = arith.constant dense<0.000000e+00> : vector<8x256xf32>
    %19 = tpu.matmul %18, %16, %cst_14 {dimension_numbers = #tpu.dot_dimension_numbers<[1], [0], [0], [1], [0, 0, 1, 1], [], []>} : vector<8x4xf32>, vector<4x256xf32>, vector<8x256xf32> -> vector<8x256xf32>
    %20 = arith.addf %11, %19 : vector<8x256xf32>
    %c15_i32 = arith.constant 15 : i32
    %21 = tpu.dynamic_rotate %1 by %c15_i32 dim 1 : vector<4x256xf32>, i32 -> vector<4x256xf32>
    %c2 = arith.constant 2 : index
    %c0_15 = arith.constant 0 : index
    %c0_16 = arith.constant 0 : index
    %22 = vector.load %arg6[%c2, %c0_15, %c0_16] : memref<9x1x256xf32, #tpu.memory_space<vmem>>, vector<1x1x256xf32>
    %23 = vector.shape_cast %22 : vector<1x1x256xf32> to vector<1x256xf32>
    %24 = vector.broadcast %23 : vector<1x256xf32> to vector<4x256xf32>
    %25 = arith.mulf %21, %24 : vector<4x256xf32>
    %c2_17 = arith.constant 2 : index
    %c0_18 = arith.constant 0 : index
    %c0_19 = arith.constant 0 : index
    %26 = vector.load %arg2[%c2_17, %c0_18, %c0_19] : memref<9x8x4xf32, #tpu.memory_space<vmem>>, vector<1x8x4xf32>
    %27 = vector.shape_cast %26 : vector<1x8x4xf32> to vector<8x4xf32>
    %cst_20 = arith.constant dense<0.000000e+00> : vector<8x256xf32>
    %28 = tpu.matmul %27, %25, %cst_20 {dimension_numbers = #tpu.dot_dimension_numbers<[1], [0], [0], [1], [0, 0, 1, 1], [], []>} : vector<8x4xf32>, vector<4x256xf32>, vector<8x256xf32> -> vector<8x256xf32>
    %29 = arith.addf %20, %28 : vector<8x256xf32>
    %c1_i32 = arith.constant 1 : i32
    %30 = tpu.dynamic_rotate %1 by %c1_i32 dim 1 : vector<4x256xf32>, i32 -> vector<4x256xf32>
    %c3 = arith.constant 3 : index
    %c0_21 = arith.constant 0 : index
    %c0_22 = arith.constant 0 : index
    %31 = vector.load %arg6[%c3, %c0_21, %c0_22] : memref<9x1x256xf32, #tpu.memory_space<vmem>>, vector<1x1x256xf32>
    %32 = vector.shape_cast %31 : vector<1x1x256xf32> to vector<1x256xf32>
    %33 = vector.broadcast %32 : vector<1x256xf32> to vector<4x256xf32>
    %34 = arith.mulf %30, %33 : vector<4x256xf32>
    %c3_23 = arith.constant 3 : index
    %c0_24 = arith.constant 0 : index
    %c0_25 = arith.constant 0 : index
    %35 = vector.load %arg2[%c3_23, %c0_24, %c0_25] : memref<9x8x4xf32, #tpu.memory_space<vmem>>, vector<1x8x4xf32>
    %36 = vector.shape_cast %35 : vector<1x8x4xf32> to vector<8x4xf32>
    %cst_26 = arith.constant dense<0.000000e+00> : vector<8x256xf32>
    %37 = tpu.matmul %36, %34, %cst_26 {dimension_numbers = #tpu.dot_dimension_numbers<[1], [0], [0], [1], [0, 0, 1, 1], [], []>} : vector<8x4xf32>, vector<4x256xf32>, vector<8x256xf32> -> vector<8x256xf32>
    %38 = arith.addf %29, %37 : vector<8x256xf32>
    %c4 = arith.constant 4 : index
    %c0_27 = arith.constant 0 : index
    %c0_28 = arith.constant 0 : index
    %39 = vector.load %arg2[%c4, %c0_27, %c0_28] : memref<9x8x4xf32, #tpu.memory_space<vmem>>, vector<1x8x4xf32>
    %40 = vector.shape_cast %39 : vector<1x8x4xf32> to vector<8x4xf32>
    %cst_29 = arith.constant dense<0.000000e+00> : vector<8x256xf32>
    %41 = tpu.matmul %40, %1, %cst_29 {dimension_numbers = #tpu.dot_dimension_numbers<[1], [0], [0], [1], [0, 0, 1, 1], [], []>} : vector<8x4xf32>, vector<4x256xf32>, vector<8x256xf32> -> vector<8x256xf32>
    %42 = arith.addf %38, %41 : vector<8x256xf32>
    %c255_i32 = arith.constant 255 : i32
    %43 = tpu.dynamic_rotate %1 by %c255_i32 dim 1 : vector<4x256xf32>, i32 -> vector<4x256xf32>
    %c5 = arith.constant 5 : index
    %c0_30 = arith.constant 0 : index
    %c0_31 = arith.constant 0 : index
    %44 = vector.load %arg6[%c5, %c0_30, %c0_31] : memref<9x1x256xf32, #tpu.memory_space<vmem>>, vector<1x1x256xf32>
    %45 = vector.shape_cast %44 : vector<1x1x256xf32> to vector<1x256xf32>
    %46 = vector.broadcast %45 : vector<1x256xf32> to vector<4x256xf32>
    %47 = arith.mulf %43, %46 : vector<4x256xf32>
    %c5_32 = arith.constant 5 : index
    %c0_33 = arith.constant 0 : index
    %c0_34 = arith.constant 0 : index
    %48 = vector.load %arg2[%c5_32, %c0_33, %c0_34] : memref<9x8x4xf32, #tpu.memory_space<vmem>>, vector<1x8x4xf32>
    %49 = vector.shape_cast %48 : vector<1x8x4xf32> to vector<8x4xf32>
    %cst_35 = arith.constant dense<0.000000e+00> : vector<8x256xf32>
    %50 = tpu.matmul %49, %47, %cst_35 {dimension_numbers = #tpu.dot_dimension_numbers<[1], [0], [0], [1], [0, 0, 1, 1], [], []>} : vector<8x4xf32>, vector<4x256xf32>, vector<8x256xf32> -> vector<8x256xf32>
    %51 = arith.addf %42, %50 : vector<8x256xf32>
    %c241_i32 = arith.constant 241 : i32
    %52 = tpu.dynamic_rotate %1 by %c241_i32 dim 1 : vector<4x256xf32>, i32 -> vector<4x256xf32>
    %c6 = arith.constant 6 : index
    %c0_36 = arith.constant 0 : index
    %c0_37 = arith.constant 0 : index
    %53 = vector.load %arg6[%c6, %c0_36, %c0_37] : memref<9x1x256xf32, #tpu.memory_space<vmem>>, vector<1x1x256xf32>
    %54 = vector.shape_cast %53 : vector<1x1x256xf32> to vector<1x256xf32>
    %55 = vector.broadcast %54 : vector<1x256xf32> to vector<4x256xf32>
    %56 = arith.mulf %52, %55 : vector<4x256xf32>
    %c6_38 = arith.constant 6 : index
    %c0_39 = arith.constant 0 : index
    %c0_40 = arith.constant 0 : index
    %57 = vector.load %arg2[%c6_38, %c0_39, %c0_40] : memref<9x8x4xf32, #tpu.memory_space<vmem>>, vector<1x8x4xf32>
    %58 = vector.shape_cast %57 : vector<1x8x4xf32> to vector<8x4xf32>
    %cst_41 = arith.constant dense<0.000000e+00> : vector<8x256xf32>
    %59 = tpu.matmul %58, %56, %cst_41 {dimension_numbers = #tpu.dot_dimension_numbers<[1], [0], [0], [1], [0, 0, 1, 1], [], []>} : vector<8x4xf32>, vector<4x256xf32>, vector<8x256xf32> -> vector<8x256xf32>
    %60 = arith.addf %51, %59 : vector<8x256xf32>
    %c240_i32 = arith.constant 240 : i32
    %61 = tpu.dynamic_rotate %1 by %c240_i32 dim 1 : vector<4x256xf32>, i32 -> vector<4x256xf32>
    %c7 = arith.constant 7 : index
    %c0_42 = arith.constant 0 : index
    %c0_43 = arith.constant 0 : index
    %62 = vector.load %arg6[%c7, %c0_42, %c0_43] : memref<9x1x256xf32, #tpu.memory_space<vmem>>, vector<1x1x256xf32>
    %63 = vector.shape_cast %62 : vector<1x1x256xf32> to vector<1x256xf32>
    %64 = vector.broadcast %63 : vector<1x256xf32> to vector<4x256xf32>
    %65 = arith.mulf %61, %64 : vector<4x256xf32>
    %c7_44 = arith.constant 7 : index
    %c0_45 = arith.constant 0 : index
    %c0_46 = arith.constant 0 : index
    %66 = vector.load %arg2[%c7_44, %c0_45, %c0_46] : memref<9x8x4xf32, #tpu.memory_space<vmem>>, vector<1x8x4xf32>
    %67 = vector.shape_cast %66 : vector<1x8x4xf32> to vector<8x4xf32>
    %cst_47 = arith.constant dense<0.000000e+00> : vector<8x256xf32>
    %68 = tpu.matmul %67, %65, %cst_47 {dimension_numbers = #tpu.dot_dimension_numbers<[1], [0], [0], [1], [0, 0, 1, 1], [], []>} : vector<8x4xf32>, vector<4x256xf32>, vector<8x256xf32> -> vector<8x256xf32>
    %69 = arith.addf %60, %68 : vector<8x256xf32>
    %c239_i32 = arith.constant 239 : i32
    %70 = tpu.dynamic_rotate %1 by %c239_i32 dim 1 : vector<4x256xf32>, i32 -> vector<4x256xf32>
    %c8 = arith.constant 8 : index
    %c0_48 = arith.constant 0 : index
    %c0_49 = arith.constant 0 : index
    %71 = vector.load %arg6[%c8, %c0_48, %c0_49] : memref<9x1x256xf32, #tpu.memory_space<vmem>>, vector<1x1x256xf32>
    %72 = vector.shape_cast %71 : vector<1x1x256xf32> to vector<1x256xf32>
    %73 = vector.broadcast %72 : vector<1x256xf32> to vector<4x256xf32>
    %74 = arith.mulf %70, %73 : vector<4x256xf32>
    %c8_50 = arith.constant 8 : index
    %c0_51 = arith.constant 0 : index
    %c0_52 = arith.constant 0 : index
    %75 = vector.load %arg2[%c8_50, %c0_51, %c0_52] : memref<9x8x4xf32, #tpu.memory_space<vmem>>, vector<1x8x4xf32>
    %76 = vector.shape_cast %75 : vector<1x8x4xf32> to vector<8x4xf32>
    %cst_53 = arith.constant dense<0.000000e+00> : vector<8x256xf32>
    %77 = tpu.matmul %76, %74, %cst_53 {dimension_numbers = #tpu.dot_dimension_numbers<[1], [0], [0], [1], [0, 0, 1, 1], [], []>} : vector<8x4xf32>, vector<4x256xf32>, vector<8x256xf32> -> vector<8x256xf32>
    %78 = arith.addf %69, %77 : vector<8x256xf32>
    %c0_54 = arith.constant 0 : index
    %c0_55 = arith.constant 0 : index
    %79 = vector.load %arg3[%c0_54, %c0_55] : memref<8x1xf32, #tpu.memory_space<vmem>>, vector<8x1xf32>
    %80 = vector.broadcast %79 : vector<8x1xf32> to vector<8x256xf32>
    %81 = arith.addf %78, %80 : vector<8x256xf32>
    %cst_56 = arith.constant 0.000000e+00 : f32
    %82 = vector.broadcast %cst_56 : f32 to vector<8x256xf32>
    %83 = arith.maximumf %81, %82 : vector<8x256xf32>
    %cst_57 = arith.constant 0.000000e+00 : f32
    %84 = vector.broadcast %cst_57 : f32 to vector<8x256xf32>
    %c17_i32_58 = arith.constant 17 : i32
    %85 = tpu.dynamic_rotate %83 by %c17_i32_58 dim 1 : vector<8x256xf32>, i32 -> vector<8x256xf32>
    %c0_59 = arith.constant 0 : index
    %c0_60 = arith.constant 0 : index
    %c0_61 = arith.constant 0 : index
    %86 = vector.load %arg6[%c0_59, %c0_60, %c0_61] : memref<9x1x256xf32, #tpu.memory_space<vmem>>, vector<1x1x256xf32>
    %87 = vector.shape_cast %86 : vector<1x1x256xf32> to vector<1x256xf32>
    %88 = vector.broadcast %87 : vector<1x256xf32> to vector<8x256xf32>
    %89 = arith.mulf %85, %88 : vector<8x256xf32>
    %c0_62 = arith.constant 0 : index
    %c0_63 = arith.constant 0 : index
    %c0_64 = arith.constant 0 : index
    %90 = vector.load %arg4[%c0_62, %c0_63, %c0_64] : memref<9x8x8xf32, #tpu.memory_space<vmem>>, vector<1x8x8xf32>
    %91 = vector.shape_cast %90 : vector<1x8x8xf32> to vector<8x8xf32>
    %cst_65 = arith.constant dense<0.000000e+00> : vector<8x256xf32>
    %92 = tpu.matmul %91, %89, %cst_65 {dimension_numbers = #tpu.dot_dimension_numbers<[1], [0], [0], [1], [0, 0, 1, 1], [], []>} : vector<8x8xf32>, vector<8x256xf32>, vector<8x256xf32> -> vector<8x256xf32>
    %93 = arith.addf %84, %92 : vector<8x256xf32>
    %c16_i32_66 = arith.constant 16 : i32
    %94 = tpu.dynamic_rotate %83 by %c16_i32_66 dim 1 : vector<8x256xf32>, i32 -> vector<8x256xf32>
    %c1_67 = arith.constant 1 : index
    %c0_68 = arith.constant 0 : index
    %c0_69 = arith.constant 0 : index
    %95 = vector.load %arg6[%c1_67, %c0_68, %c0_69] : memref<9x1x256xf32, #tpu.memory_space<vmem>>, vector<1x1x256xf32>
    %96 = vector.shape_cast %95 : vector<1x1x256xf32> to vector<1x256xf32>
    %97 = vector.broadcast %96 : vector<1x256xf32> to vector<8x256xf32>
    %98 = arith.mulf %94, %97 : vector<8x256xf32>
    %c1_70 = arith.constant 1 : index
    %c0_71 = arith.constant 0 : index
    %c0_72 = arith.constant 0 : index
    %99 = vector.load %arg4[%c1_70, %c0_71, %c0_72] : memref<9x8x8xf32, #tpu.memory_space<vmem>>, vector<1x8x8xf32>
    %100 = vector.shape_cast %99 : vector<1x8x8xf32> to vector<8x8xf32>
    %cst_73 = arith.constant dense<0.000000e+00> : vector<8x256xf32>
    %101 = tpu.matmul %100, %98, %cst_73 {dimension_numbers = #tpu.dot_dimension_numbers<[1], [0], [0], [1], [0, 0, 1, 1], [], []>} : vector<8x8xf32>, vector<8x256xf32>, vector<8x256xf32> -> vector<8x256xf32>
    %102 = arith.addf %93, %101 : vector<8x256xf32>
    %c15_i32_74 = arith.constant 15 : i32
    %103 = tpu.dynamic_rotate %83 by %c15_i32_74 dim 1 : vector<8x256xf32>, i32 -> vector<8x256xf32>
    %c2_75 = arith.constant 2 : index
    %c0_76 = arith.constant 0 : index
    %c0_77 = arith.constant 0 : index
    %104 = vector.load %arg6[%c2_75, %c0_76, %c0_77] : memref<9x1x256xf32, #tpu.memory_space<vmem>>, vector<1x1x256xf32>
    %105 = vector.shape_cast %104 : vector<1x1x256xf32> to vector<1x256xf32>
    %106 = vector.broadcast %105 : vector<1x256xf32> to vector<8x256xf32>
    %107 = arith.mulf %103, %106 : vector<8x256xf32>
    %c2_78 = arith.constant 2 : index
    %c0_79 = arith.constant 0 : index
    %c0_80 = arith.constant 0 : index
    %108 = vector.load %arg4[%c2_78, %c0_79, %c0_80] : memref<9x8x8xf32, #tpu.memory_space<vmem>>, vector<1x8x8xf32>
    %109 = vector.shape_cast %108 : vector<1x8x8xf32> to vector<8x8xf32>
    %cst_81 = arith.constant dense<0.000000e+00> : vector<8x256xf32>
    %110 = tpu.matmul %109, %107, %cst_81 {dimension_numbers = #tpu.dot_dimension_numbers<[1], [0], [0], [1], [0, 0, 1, 1], [], []>} : vector<8x8xf32>, vector<8x256xf32>, vector<8x256xf32> -> vector<8x256xf32>
    %111 = arith.addf %102, %110 : vector<8x256xf32>
    %c1_i32_82 = arith.constant 1 : i32
    %112 = tpu.dynamic_rotate %83 by %c1_i32_82 dim 1 : vector<8x256xf32>, i32 -> vector<8x256xf32>
    %c3_83 = arith.constant 3 : index
    %c0_84 = arith.constant 0 : index
    %c0_85 = arith.constant 0 : index
    %113 = vector.load %arg6[%c3_83, %c0_84, %c0_85] : memref<9x1x256xf32, #tpu.memory_space<vmem>>, vector<1x1x256xf32>
    %114 = vector.shape_cast %113 : vector<1x1x256xf32> to vector<1x256xf32>
    %115 = vector.broadcast %114 : vector<1x256xf32> to vector<8x256xf32>
    %116 = arith.mulf %112, %115 : vector<8x256xf32>
    %c3_86 = arith.constant 3 : index
    %c0_87 = arith.constant 0 : index
    %c0_88 = arith.constant 0 : index
    %117 = vector.load %arg4[%c3_86, %c0_87, %c0_88] : memref<9x8x8xf32, #tpu.memory_space<vmem>>, vector<1x8x8xf32>
    %118 = vector.shape_cast %117 : vector<1x8x8xf32> to vector<8x8xf32>
    %cst_89 = arith.constant dense<0.000000e+00> : vector<8x256xf32>
    %119 = tpu.matmul %118, %116, %cst_89 {dimension_numbers = #tpu.dot_dimension_numbers<[1], [0], [0], [1], [0, 0, 1, 1], [], []>} : vector<8x8xf32>, vector<8x256xf32>, vector<8x256xf32> -> vector<8x256xf32>
    %120 = arith.addf %111, %119 : vector<8x256xf32>
    %c4_90 = arith.constant 4 : index
    %c0_91 = arith.constant 0 : index
    %c0_92 = arith.constant 0 : index
    %121 = vector.load %arg4[%c4_90, %c0_91, %c0_92] : memref<9x8x8xf32, #tpu.memory_space<vmem>>, vector<1x8x8xf32>
    %122 = vector.shape_cast %121 : vector<1x8x8xf32> to vector<8x8xf32>
    %cst_93 = arith.constant dense<0.000000e+00> : vector<8x256xf32>
    %123 = tpu.matmul %122, %83, %cst_93 {dimension_numbers = #tpu.dot_dimension_numbers<[1], [0], [0], [1], [0, 0, 1, 1], [], []>} : vector<8x8xf32>, vector<8x256xf32>, vector<8x256xf32> -> vector<8x256xf32>
    %124 = arith.addf %120, %123 : vector<8x256xf32>
    %c255_i32_94 = arith.constant 255 : i32
    %125 = tpu.dynamic_rotate %83 by %c255_i32_94 dim 1 : vector<8x256xf32>, i32 -> vector<8x256xf32>
    %c5_95 = arith.constant 5 : index
    %c0_96 = arith.constant 0 : index
    %c0_97 = arith.constant 0 : index
    %126 = vector.load %arg6[%c5_95, %c0_96, %c0_97] : memref<9x1x256xf32, #tpu.memory_space<vmem>>, vector<1x1x256xf32>
    %127 = vector.shape_cast %126 : vector<1x1x256xf32> to vector<1x256xf32>
    %128 = vector.broadcast %127 : vector<1x256xf32> to vector<8x256xf32>
    %129 = arith.mulf %125, %128 : vector<8x256xf32>
    %c5_98 = arith.constant 5 : index
    %c0_99 = arith.constant 0 : index
    %c0_100 = arith.constant 0 : index
    %130 = vector.load %arg4[%c5_98, %c0_99, %c0_100] : memref<9x8x8xf32, #tpu.memory_space<vmem>>, vector<1x8x8xf32>
    %131 = vector.shape_cast %130 : vector<1x8x8xf32> to vector<8x8xf32>
    %cst_101 = arith.constant dense<0.000000e+00> : vector<8x256xf32>
    %132 = tpu.matmul %131, %129, %cst_101 {dimension_numbers = #tpu.dot_dimension_numbers<[1], [0], [0], [1], [0, 0, 1, 1], [], []>} : vector<8x8xf32>, vector<8x256xf32>, vector<8x256xf32> -> vector<8x256xf32>
    %133 = arith.addf %124, %132 : vector<8x256xf32>
    %c241_i32_102 = arith.constant 241 : i32
    %134 = tpu.dynamic_rotate %83 by %c241_i32_102 dim 1 : vector<8x256xf32>, i32 -> vector<8x256xf32>
    %c6_103 = arith.constant 6 : index
    %c0_104 = arith.constant 0 : index
    %c0_105 = arith.constant 0 : index
    %135 = vector.load %arg6[%c6_103, %c0_104, %c0_105] : memref<9x1x256xf32, #tpu.memory_space<vmem>>, vector<1x1x256xf32>
    %136 = vector.shape_cast %135 : vector<1x1x256xf32> to vector<1x256xf32>
    %137 = vector.broadcast %136 : vector<1x256xf32> to vector<8x256xf32>
    %138 = arith.mulf %134, %137 : vector<8x256xf32>
    %c6_106 = arith.constant 6 : index
    %c0_107 = arith.constant 0 : index
    %c0_108 = arith.constant 0 : index
    %139 = vector.load %arg4[%c6_106, %c0_107, %c0_108] : memref<9x8x8xf32, #tpu.memory_space<vmem>>, vector<1x8x8xf32>
    %140 = vector.shape_cast %139 : vector<1x8x8xf32> to vector<8x8xf32>
    %cst_109 = arith.constant dense<0.000000e+00> : vector<8x256xf32>
    %141 = tpu.matmul %140, %138, %cst_109 {dimension_numbers = #tpu.dot_dimension_numbers<[1], [0], [0], [1], [0, 0, 1, 1], [], []>} : vector<8x8xf32>, vector<8x256xf32>, vector<8x256xf32> -> vector<8x256xf32>
    %142 = arith.addf %133, %141 : vector<8x256xf32>
    %c240_i32_110 = arith.constant 240 : i32
    %143 = tpu.dynamic_rotate %83 by %c240_i32_110 dim 1 : vector<8x256xf32>, i32 -> vector<8x256xf32>
    %c7_111 = arith.constant 7 : index
    %c0_112 = arith.constant 0 : index
    %c0_113 = arith.constant 0 : index
    %144 = vector.load %arg6[%c7_111, %c0_112, %c0_113] : memref<9x1x256xf32, #tpu.memory_space<vmem>>, vector<1x1x256xf32>
    %145 = vector.shape_cast %144 : vector<1x1x256xf32> to vector<1x256xf32>
    %146 = vector.broadcast %145 : vector<1x256xf32> to vector<8x256xf32>
    %147 = arith.mulf %143, %146 : vector<8x256xf32>
    %c7_114 = arith.constant 7 : index
    %c0_115 = arith.constant 0 : index
    %c0_116 = arith.constant 0 : index
    %148 = vector.load %arg4[%c7_114, %c0_115, %c0_116] : memref<9x8x8xf32, #tpu.memory_space<vmem>>, vector<1x8x8xf32>
    %149 = vector.shape_cast %148 : vector<1x8x8xf32> to vector<8x8xf32>
    %cst_117 = arith.constant dense<0.000000e+00> : vector<8x256xf32>
    %150 = tpu.matmul %149, %147, %cst_117 {dimension_numbers = #tpu.dot_dimension_numbers<[1], [0], [0], [1], [0, 0, 1, 1], [], []>} : vector<8x8xf32>, vector<8x256xf32>, vector<8x256xf32> -> vector<8x256xf32>
    %151 = arith.addf %142, %150 : vector<8x256xf32>
    %c239_i32_118 = arith.constant 239 : i32
    %152 = tpu.dynamic_rotate %83 by %c239_i32_118 dim 1 : vector<8x256xf32>, i32 -> vector<8x256xf32>
    %c8_119 = arith.constant 8 : index
    %c0_120 = arith.constant 0 : index
    %c0_121 = arith.constant 0 : index
    %153 = vector.load %arg6[%c8_119, %c0_120, %c0_121] : memref<9x1x256xf32, #tpu.memory_space<vmem>>, vector<1x1x256xf32>
    %154 = vector.shape_cast %153 : vector<1x1x256xf32> to vector<1x256xf32>
    %155 = vector.broadcast %154 : vector<1x256xf32> to vector<8x256xf32>
    %156 = arith.mulf %152, %155 : vector<8x256xf32>
    %c8_122 = arith.constant 8 : index
    %c0_123 = arith.constant 0 : index
    %c0_124 = arith.constant 0 : index
    %157 = vector.load %arg4[%c8_122, %c0_123, %c0_124] : memref<9x8x8xf32, #tpu.memory_space<vmem>>, vector<1x8x8xf32>
    %158 = vector.shape_cast %157 : vector<1x8x8xf32> to vector<8x8xf32>
    %cst_125 = arith.constant dense<0.000000e+00> : vector<8x256xf32>
    %159 = tpu.matmul %158, %156, %cst_125 {dimension_numbers = #tpu.dot_dimension_numbers<[1], [0], [0], [1], [0, 0, 1, 1], [], []>} : vector<8x8xf32>, vector<8x256xf32>, vector<8x256xf32> -> vector<8x256xf32>
    %160 = arith.addf %151, %159 : vector<8x256xf32>
    %c0_126 = arith.constant 0 : index
    %c0_127 = arith.constant 0 : index
    %161 = vector.load %arg5[%c0_126, %c0_127] : memref<8x1xf32, #tpu.memory_space<vmem>>, vector<8x1xf32>
    %162 = vector.broadcast %161 : vector<8x1xf32> to vector<8x256xf32>
    %163 = arith.addf %160, %162 : vector<8x256xf32>
    %cst_128 = arith.constant 0.000000e+00 : f32
    %164 = vector.broadcast %cst_128 : f32 to vector<8x256xf32>
    %165 = arith.maximumf %163, %164 : vector<8x256xf32>
    %c0_129 = arith.constant 0 : index
    %c0_130 = arith.constant 0 : index
    %c0_131 = arith.constant 0 : index
    %166 = vector.load %arg7[%c0_129, %c0_130, %c0_131] : memref<1x8x256xf32, #tpu.memory_space<vmem>>, vector<1x8x256xf32>
    %167 = vector.shape_cast %166 : vector<1x8x256xf32> to vector<8x256xf32>
    %168 = vector.shape_cast %165 : vector<8x256xf32> to vector<1x8x256xf32>
    tpu.vector_store %arg7[%c0_129, %c0_130, %c0_131], %168 {strides = array<i32>} : memref<1x8x256xf32, #tpu.memory_space<vmem>>, vector<1x8x256xf32>,
    return
  }
  func.func @transform_0(%arg0: i32) -> (i32, i32, i32) {
    %c0_i32 = arith.constant 0 : i32
    %c0_i32_0 = arith.constant 0 : i32
    %c0_i32_1 = arith.constant 0 : i32
    return %arg0, %c0_i32, %c0_i32_0 : i32, i32, i32
  }
  func.func @transform_1(%arg0: i32) -> (i32, i32, i32) {
    %c0_i32 = arith.constant 0 : i32
    %c0_i32_0 = arith.constant 0 : i32
    %c0_i32_1 = arith.constant 0 : i32
    %c0_i32_2 = arith.constant 0 : i32
    return %c0_i32, %c0_i32_0, %c0_i32_1 : i32, i32, i32
  }
  func.func @transform_2(%arg0: i32) -> (i32, i32) {
    %c0_i32 = arith.constant 0 : i32
    %c0_i32_0 = arith.constant 0 : i32
    %c0_i32_1 = arith.constant 0 : i32
    return %c0_i32, %c0_i32_0 : i32, i32
  }
  func.func @transform_3(%arg0: i32) -> (i32, i32, i32) {
    %c0_i32 = arith.constant 0 : i32
    %c0_i32_0 = arith.constant 0 : i32
    %c0_i32_1 = arith.constant 0 : i32
    %c0_i32_2 = arith.constant 0 : i32
    return %c0_i32, %c0_i32_0, %c0_i32_1 : i32, i32, i32
  }
  func.func @transform_4(%arg0: i32) -> (i32, i32) {
    %c0_i32 = arith.constant 0 : i32
    %c0_i32_0 = arith.constant 0 : i32
    %c0_i32_1 = arith.constant 0 : i32
    return %c0_i32, %c0_i32_0 : i32, i32
  }
  func.func @transform_5(%arg0: i32) -> (i32, i32, i32) {
    %c0_i32 = arith.constant 0 : i32
    %c0_i32_0 = arith.constant 0 : i32
    %c0_i32_1 = arith.constant 0 : i32
    %c0_i32_2 = arith.constant 0 : i32
    return %c0_i32, %c0_i32_0, %c0_i32_1 : i32, i32, i32
  }
  func.func @transform_6(%arg0: i32) -> (i32, i32, i32) {
    %c0_i32 = arith.constant 0 : i32
    %c0_i32_0 = arith.constant 0 : i32
    %c0_i32_1 = arith.constant 0 : i32
    return %arg0, %c0_i32, %c0_i32_0 : i32, i32, i32
  }
}

</mosaic_0001>

<llo_original>
// kernel: conv_no_pool.1
$region0: #{conv_no_pool.1}
  #allocation0 [shape = 'u32[]', space=smem, size = 0x4, offset = 0x4, fixed_abs, tag = 'smem constant byte address 0x4 - core index']
  #allocation1 [shape = 'u32[72,128]{1,0:T(1,128)}', space=vmem, size = 0x9000, scoped, tag = 'internal scratch']
  %s0 = inlined_call_operand.vmem [shape: f32[2,4,256], index: 0, kind: input, shape index: {}]
  %s1 = inlined_call_operand.vmem [shape: f32[9,8,4], index: 1, kind: input, shape index: {}]
  %s2 = inlined_call_operand.vmem [shape: f32[8,1], index: 2, kind: input, shape index: {}]
  %s3 = inlined_call_operand.vmem [shape: f32[9,8,8], index: 3, kind: input, shape index: {}]
  %s4 = inlined_call_operand.vmem [shape: f32[8,1], index: 4, kind: input, shape index: {}]
  %s5 = inlined_call_operand.vmem [shape: f32[9,1,256], index: 5, kind: input, shape index: {}]
  %s6 = inlined_call_operand.vmem [shape: f32[2,8,256], index: 6, kind: output, shape index: {}]
  %s7 = sld [smem:[#allocation0]]
  $region57: #{conv_no_pool.1} parent=0
    _
  %s9 = ssub.s32 1, %s7
  %s10 = scalar_select 0, %s9, %s7
  loop: start=0, step=1, limit=4
  $region2: #{conv_no_pool.1} parent=0 // loop_pre_header
    _
  $region3: #{conv_no_pool.1} parent=0 // loop_header
    %s12 = sphi 0, %s16
    %p13 = scmp.ge.s32.totalorder %s12, 4
    %s22 = sphi 0, %s24
    %s25 = sphi 0, %s22
    %s26 = sphi 0, %s25
    %s42 = sphi 0, %s26
    %s46 = sphi 0, %s46
    %s48 = sphi 0, %s46
    %s49 = sphi 0, %s48
    %s63 = sphi 0, %s49
    %s67 = sphi 0, %s67
    %s69 = sphi 0, %s67
    %s70 = sphi 0, %s69
    %s84 = sphi 0, %s70
    %s88 = sphi 0, %s88
    %s90 = sphi 0, %s88
    %s91 = sphi 0, %s90
    %s105 = sphi 0, %s91
    %s109 = sphi 0, %s109
    %s111 = sphi 0, %s109
    %s112 = sphi 0, %s111
    %s126 = sphi 0, %s112
    %s130 = sphi 0, %s130
    %s132 = sphi 0, %s130
    %s133 = sphi 0, %s132
    %s147 = sphi 0, %s133
    %s153 = sphi 0, %s155
    %s156 = sphi 0, %s153
    %s157 = sphi 0, %s156
    %s173 = sphi 0, %s157
  $region4: #{conv_no_pool.1} parent=0 // loop_header_branch
    %15 = sbr.rel (%p13) target = $region8
  $region5: #{conv_no_pool.1} parent=0 // loop_body
    %s17 = ssub.s32 %s12, 1
    %s18 = ssub.s32 %s12, 2
    %s19 = sadd.s32 %s12, 1
    %s20 = ssub.s32 %s12, %s19
    %p21 = scmp.eq.s32.totalorder %s20, 0
    %s23 = sadd.s32 %s22, 1
    %s24 = scalar_select %p21, %s22, %s23
    %p27 = pneg %p21
    %p28 = scmp.eq.s32.totalorder %s12, 1
    %p29 = por %p27, %p28
    %p30 = scmp.ne.s32.totalorder %s22, %s25
    %p31 = scmp.eq.s32.totalorder %s12, 0
    %p32 = por %p30, %p31
    %p33 = scmp.ne.s32.totalorder %s22, %s25
    %p34 = scmp.eq.s32.totalorder %s17, 1
    %p35 = por %p33, %p34
    %p36 = scmp.ne.s32.totalorder %s25, %s26
    %p37 = scmp.eq.s32.totalorder %s17, 0
    %p38 = por %p36, %p37
    %p39 = scmp.ne.s32.totalorder %s25, %s26
    %p40 = scmp.eq.s32.totalorder %s18, 1
    %p41 = por %p39, %p40
    %p43 = scmp.ne.s32.totalorder %s26, %s42
    %p44 = scmp.eq.s32.totalorder %s18, 0
    %p45 = por %p43, %p44
    %s47 = sadd.s32 %s46, 1
    %p50 = scmp.eq.s32.totalorder %s12, 1
    %p51 = scmp.ne.s32.totalorder %s46, %s48
    %p52 = scmp.eq.s32.totalorder %s12, 0
    %p53 = por %p51, %p52
    %p54 = scmp.ne.s32.totalorder %s46, %s48
    %p55 = scmp.eq.s32.totalorder %s17, 1
    %p56 = por %p54, %p55
    %p57 = scmp.ne.s32.totalorder %s48, %s49
    %p58 = scmp.eq.s32.totalorder %s17, 0
    %p59 = por %p57, %p58
    %p60 = scmp.ne.s32.totalorder %s48, %s49
    %p61 = scmp.eq.s32.totalorder %s18, 1
    %p62 = por %p60, %p61
    %p64 = scmp.ne.s32.totalorder %s49, %s63
    %p65 = scmp.eq.s32.totalorder %s18, 0
    %p66 = por %p64, %p65
    %s68 = sadd.s32 %s67, 1
    %p71 = scmp.eq.s32.totalorder %s12, 1
    %p72 = scmp.ne.s32.totalorder %s67, %s69
    %p73 = scmp.eq.s32.totalorder %s12, 0
    %p74 = por %p72, %p73
    %p75 = scmp.ne.s32.totalorder %s67, %s69
    %p76 = scmp.eq.s32.totalorder %s17, 1
    %p77 = por %p75, %p76
    %p78 = scmp.ne.s32.totalorder %s69, %s70
    %p79 = scmp.eq.s32.totalorder %s17, 0
    %p80 = por %p78, %p79
    %p81 = scmp.ne.s32.totalorder %s69, %s70
    %p82 = scmp.eq.s32.totalorder %s18, 1
    %p83 = por %p81, %p82
    %p85 = scmp.ne.s32.totalorder %s70, %s84
    %p86 = scmp.eq.s32.totalorder %s18, 0
    %p87 = por %p85, %p86
    %s89 = sadd.s32 %s88, 1
    %p92 = scmp.eq.s32.totalorder %s12, 1
    %p93 = scmp.ne.s32.totalorder %s88, %s90
    %p94 = scmp.eq.s32.totalorder %s12, 0
    %p95 = por %p93, %p94
    %p96 = scmp.ne.s32.totalorder %s88, %s90
    %p97 = scmp.eq.s32.totalorder %s17, 1
    %p98 = por %p96, %p97
    %p99 = scmp.ne.s32.totalorder %s90, %s91
    %p100 = scmp.eq.s32.totalorder %s17, 0
    %p101 = por %p99, %p100
    %p102 = scmp.ne.s32.totalorder %s90, %s91
    %p103 = scmp.eq.s32.totalorder %s18, 1
    %p104 = por %p102, %p103
    %p106 = scmp.ne.s32.totalorder %s91, %s105
    %p107 = scmp.eq.s32.totalorder %s18, 0
    %p108 = por %p106, %p107
    %s110 = sadd.s32 %s109, 1
    %p113 = scmp.eq.s32.totalorder %s12, 1
    %p114 = scmp.ne.s32.totalorder %s109, %s111
    %p115 = scmp.eq.s32.totalorder %s12, 0
    %p116 = por %p114, %p115
    %p117 = scmp.ne.s32.totalorder %s109, %s111
    %p118 = scmp.eq.s32.totalorder %s17, 1
    %p119 = por %p117, %p118
    %p120 = scmp.ne.s32.totalorder %s111, %s112
    %p121 = scmp.eq.s32.totalorder %s17, 0
    %p122 = por %p120, %p121
    %p123 = scmp.ne.s32.totalorder %s111, %s112
    %p124 = scmp.eq.s32.totalorder %s18, 1
    %p125 = por %p123, %p124
    %p127 = scmp.ne.s32.totalorder %s112, %s126
    %p128 = scmp.eq.s32.totalorder %s18, 0
    %p129 = por %p127, %p128
    %s131 = sadd.s32 %s130, 1
    %p134 = scmp.eq.s32.totalorder %s12, 1
    %p135 = scmp.ne.s32.totalorder %s130, %s132
    %p136 = scmp.eq.s32.totalorder %s12, 0
    %p137 = por %p135, %p136
    %p138 = scmp.ne.s32.totalorder %s130, %s132
    %p139 = scmp.eq.s32.totalorder %s17, 1
    %p140 = por %p138, %p139
    %p141 = scmp.ne.s32.totalorder %s132, %s133
    %p142 = scmp.eq.s32.totalorder %s17, 0
    %p143 = por %p141, %p142
    %p144 = scmp.ne.s32.totalorder %s132, %s133
    %p145 = scmp.eq.s32.totalorder %s18, 1
    %p146 = por %p144, %p145
    %p148 = scmp.ne.s32.totalorder %s133, %s147
    %p149 = scmp.eq.s32.totalorder %s18, 0
    %p150 = por %p148, %p149
    %s151 = ssub.s32 %s12, %s19
    %p152 = scmp.eq.s32.totalorder %s151, 0
    %s154 = sadd.s32 %s153, 1
    %s155 = scalar_select %p152, %s153, %s154
    %p158 = pneg %p152
    %p159 = scmp.eq.s32.totalorder %s12, 1
    %p160 = por %p158, %p159
    %p161 = scmp.ne.s32.totalorder %s153, %s156
    %p162 = scmp.eq.s32.totalorder %s12, 0
    %p163 = por %p161, %p162
    %p164 = scmp.ne.s32.totalorder %s153, %s156
    %p165 = scmp.eq.s32.totalorder %s17, 1
    %p166 = por %p164, %p165
    %p167 = scmp.ne.s32.totalorder %s156, %s157
    %p168 = scmp.eq.s32.totalorder %s17, 0
    %p169 = por %p167, %p168
    %p170 = scmp.ne.s32.totalorder %s156, %s157
    %p171 = scmp.eq.s32.totalorder %s18, 1
    %p172 = por %p170, %p171
    %p174 = scmp.ne.s32.totalorder %s157, %s173
    %p175 = scmp.eq.s32.totalorder %s18, 0
    %p176 = por %p174, %p175
    %p177 = scmp.le.s32.totalorder 1, %s12
    %p178 = scmp.lt.s32.totalorder %s12, 3
    %p179 = pnand %p177, %p178
    %p180 = pneg %p179
    // Predicated region
    $region9: #{conv_no_pool.1} parent=5 // pred_check
      _
    $region10: #{conv_no_pool.1} parent=5 // pred_check_branch
      %182 = sbr.rel (%p179) target = $region12
    $region11: #{conv_no_pool.1} parent=5 // pred_region
      %s183 = ssub.s32 %s12, 1
      // Predicated region
      $region13: #{conv_no_pool.1} parent=11 // pred_check
        %p184 = pneg %p59
      $region14: #{conv_no_pool.1} parent=11 // pred_check_branch
        %186 = sbr.rel (%p184) target = $region16
      $region15: #{conv_no_pool.1} parent=11 // pred_region
        _
      $region16: #{conv_no_pool.1} parent=11 // pred_fallthru
        _
      // Predicated region
      $region17: #{conv_no_pool.1} parent=11 // pred_check
        %p187 = pneg %p80
      $region18: #{conv_no_pool.1} parent=11 // pred_check_branch
        %189 = sbr.rel (%p187) target = $region20
      $region19: #{conv_no_pool.1} parent=11 // pred_region
        _
      $region20: #{conv_no_pool.1} parent=11 // pred_fallthru
        _
      // Predicated region
      $region21: #{conv_no_pool.1} parent=11 // pred_check
        %p190 = pneg %p101
      $region22: #{conv_no_pool.1} parent=11 // pred_check_branch
        %192 = sbr.rel (%p190) target = $region24
      $region23: #{conv_no_pool.1} parent=11 // pred_region
        _
      $region24: #{conv_no_pool.1} parent=11 // pred_fallthru
        _
      // Predicated region
      $region25: #{conv_no_pool.1} parent=11 // pred_check
        %p193 = pneg %p122
      $region26: #{conv_no_pool.1} parent=11 // pred_check_branch
        %195 = sbr.rel (%p193) target = $region28
      $region27: #{conv_no_pool.1} parent=11 // pred_region
        _
      $region28: #{conv_no_pool.1} parent=11 // pred_fallthru
        _
      // Predicated region
      $region29: #{conv_no_pool.1} parent=11 // pred_check
        %p196 = pneg %p143
      $region30: #{conv_no_pool.1} parent=11 // pred_check_branch
        %198 = sbr.rel (%p196) target = $region32
      $region31: #{conv_no_pool.1} parent=11 // pred_region
        _
      $region32: #{conv_no_pool.1} parent=11 // pred_fallthru
        _
    $region12: #{conv_no_pool.1} parent=5 // pred_fallthru
      _
    %p199 = scmp.lt.s32.totalorder %s12, 2
    // Predicated region
    $region33: #{conv_no_pool.1} parent=5 // pred_check
      %p200 = pneg %p199
    $region34: #{conv_no_pool.1} parent=5 // pred_check_branch
      %202 = sbr.rel (%p200) target = $region36
    $region35: #{conv_no_pool.1} parent=5 // pred_region
      // Predicated region
      $region37: #{conv_no_pool.1} parent=35 // pred_check
        %p203 = pneg %p32
      $region38: #{conv_no_pool.1} parent=35 // pred_check_branch
        %205 = sbr.rel (%p203) target = $region40
      $region39: #{conv_no_pool.1} parent=35 // pred_region
        %p206 = scmp.lt.s32.totalorder %s12, 1
        %s207 = scalar_select %p206, %s12, 1
        %s208 = smul.addr %s207, 2
        %s209 = smul.addr %s208, 4
        %s210 = scalar_lea.vmem %s0, %s209
      $region40: #{conv_no_pool.1} parent=35 // pred_fallthru
        _
    $region36: #{conv_no_pool.1} parent=5 // pred_fallthru
      _
    %p211 = scmp.le.s32.totalorder 1, %s12
    %p212 = scmp.lt.s32.totalorder %s12, 3
    %p213 = pnand %p211, %p212
    %p214 = pneg %p213
    // Predicated region
    $region41: #{conv_no_pool.1} parent=5 // pred_check
      _
    $region42: #{conv_no_pool.1} parent=5 // pred_check_branch
      %216 = sbr.rel (%p213) target = $region44
    $region43: #{conv_no_pool.1} parent=5 // pred_region
      %s217 = ssub.s32 %s12, 1
      %p218 = scmp.lt.s32.totalorder %s17, 1
      %s219 = scalar_select %p218, %s17, 1
      %s220 = smul.addr %s219, 2
      %s221 = smul.addr %s220, 4
      %s222 = scalar_lea.vmem %s0, %s221
      %p223 = pneg %p38
      %p224 = pneg %p35
      %p225 = pneg %p59
      %p226 = pneg %p56
      %p227 = pneg %p80
      %p228 = pneg %p77
      %p229 = pneg %p101
      %p230 = pneg %p98
      %p231 = pneg %p122
      %p232 = pneg %p119
      %p233 = pneg %p143
      %p234 = pneg %p140
      %p235 = pneg %p169
      %p236 = pneg %p166
      %p237 = scmp.lt.s32.totalorder %s17, 1
      %s238 = scalar_select %p237, %s17, 1
      %s239 = smul.addr %s238, 2
      %s240 = smul.addr %s239, 8
      %s241 = scalar_lea.vmem %s6, %s240
      %p242 = scmp.lt.s32.totalorder %s17, 1
      %s243 = scalar_select %p242, %s17, 1
      %s244 = smul.addr %s243, 2
      %s245 = smul.addr %s244, 4
      %s246 = scalar_lea.vmem %s0, %s245
      %p247 = scmp.lt.s32.totalorder %s17, 1
      %s248 = scalar_select %p247, %s17, 1
      %s249 = smul.addr %s248, 2
      %s250 = smul.addr %s249, 8
      %s251 = scalar_lea.vmem %s6, %s250
      %v252 = vld [vmem:[%s246] sm:$0xff]
      %254 = vst [vmem:[#allocation1] ss:$2 sm:$0xff] %v252
      %v255 = vld.sshfl [vmem:[#allocation1] sm:$0xff pattern:$0x75316420]
      %v256 = vld.sshfl [vmem:[#allocation1 + $0x8] sm:$0xff pattern:$0x75316420]
      %259 = vrot.lane.b32.xlu0 %v255, 17
      %v260 = vpop.permute.xlu0 %259
      %261 = vrot.lane.b32.xlu0 %v256, 17
      %v262 = vpop.permute.xlu0 %261
      %v263 = vlaneseq
      %v264 = vand.u32 %v263, 127
      %vm265 = vcmp.lt.s32.totalorder %v264, 17
      %v266 = vsel %vm265, %v260, %v262
      %v267 = vsel %vm265, %v262, %v260
      %v268 = vld [vmem:[%s5] sm:$0x3]
      %v270 = vperm.slane %v268, 0
      %v271 = vperm.slane %v268, 1
      %v274 = vmul.f32 %v267, %v270
      %v275 = vmul.f32 %v266, %v271
      %v276 = vld [vmem:[%s1] sm:$0xff]
      %277 = vst [vmem:[#allocation1] ss:$2 sm:$0xff] %v252
      %v278 = vld.sshfl [vmem:[#allocation1] sm:$0xff pattern:$0x75316420]
      %v279 = vld.sshfl [vmem:[#allocation1 + $0x8] sm:$0xff pattern:$0x75316420]
      %282 = vrot.lane.b32.xlu0 %v278, 16
      %v283 = vpop.permute.xlu0 %282
      %284 = vrot.lane.b32.xlu0 %v279, 16
      %v285 = vpop.permute.xlu0 %284
      %vm286 = vcmp.lt.s32.totalorder %v264, 16
      %v287 = vsel %vm286, %v283, %v285
      %v288 = vsel %vm286, %v285, %v283
      %s289 = scalar_lea.vmem %s5, 2
      %v290 = vld [vmem:[%s289] sm:$0x3]
      %v292 = vperm.slane %v290, 0
      %v293 = vperm.slane %v290, 1
      %v296 = vmul.f32 %v288, %v292
      %v297 = vmul.f32 %v287, %v293
      %s298 = scalar_lea.vmem %s1, 8
      %v299 = vld [vmem:[%s298] sm:$0xff]
      %vm300 = vcmask 31744
      %v302 = vsel %vm300, %v299, 0
      %vm304 = vcmask 1043456
      %v306 = vsel %vm304, %v296, 0
      %v309 = vsel %vm304, %v297, 0
      %311 = vmatpush.msra.mxu0 0.0
      %312 = vmatpush.msra.mxu0 0.0
      %313 = vmatpush.msra.mxu0 0.0
      %314 = vmatpush.msra.mxu0 0.0
      %315 = vmatpush.msra.mxu0 0.0
      %316 = vmatpush.msra.mxu0 0.0
      %317 = vmatpush.msra.mxu0 0.0
      %318 = vmatpush.msra.mxu0 0.0
      %319 = vmatpush.msra.mxu0 0.0
      %320 = vmatpush.msra.mxu0 0.0
      %321 = vmatpush.msra.mxu0 0.0
      %322 = vmatpush.msra.mxu0 0.0
      %323 = vmatpush.msra.mxu0 0.0
      %324 = vmatpush.msra.mxu0 0.0
      %325 = vmatpush.msra.mxu0 0.0
      %326 = vmatpush.msra.mxu0 %v306
      %327 = vmatmul.f32.gmra.mxu0 %v302
      %v328 = vpop.f32.mrf.mxu0
      %v329 = vadd.f32 0.0, %v328
      %330 = vdwg.mxu0
      %331 = vmatpush.msra.mxu0 0.0
      %332 = vmatpush.msra.mxu0 0.0
      %333 = vmatpush.msra.mxu0 0.0
      %334 = vmatpush.msra.mxu0 0.0
      %335 = vmatpush.msra.mxu0 0.0
      %336 = vmatpush.msra.mxu0 0.0
      %337 = vmatpush.msra.mxu0 0.0
      %338 = vmatpush.msra.mxu0 0.0
      %339 = vmatpush.msra.mxu0 0.0
      %340 = vmatpush.msra.mxu0 0.0
      %341 = vmatpush.msra.mxu0 0.0
      %342 = vmatpush.msra.mxu0 0.0
      %343 = vmatpush.msra.mxu0 0.0
      %344 = vmatpush.msra.mxu0 0.0
      %345 = vmatpush.msra.mxu0 0.0
      %346 = vmatpush.msra.mxu0 %v309
      %347 = vmatmul.f32.gmra.mxu0 %v302
      %v348 = vpop.f32.mrf.mxu0
      %v349 = vadd.f32 0.0, %v348
      %350 = vdwg.mxu0
      %v352 = vsel %vm300, %v276, 0
      %v355 = vsel %vm304, %v274, 0
      %v358 = vsel %vm304, %v275, 0
      %360 = vmatpush.msra.mxu0 0.0
      %361 = vmatpush.msra.mxu0 0.0
      %362 = vmatpush.msra.mxu0 0.0
      %363 = vmatpush.msra.mxu0 0.0
      %364 = vmatpush.msra.mxu0 0.0
      %365 = vmatpush.msra.mxu0 0.0
      %366 = vmatpush.msra.mxu0 0.0
      %367 = vmatpush.msra.mxu0 0.0
      %368 = vmatpush.msra.mxu0 0.0
      %369 = vmatpush.msra.mxu0 0.0
      %370 = vmatpush.msra.mxu0 0.0
      %371 = vmatpush.msra.mxu0 0.0
      %372 = vmatpush.msra.mxu0 0.0
      %373 = vmatpush.msra.mxu0 0.0
      %374 = vmatpush.msra.mxu0 0.0
      %375 = vmatpush.msra.mxu0 %v355
      %376 = vmatmul.f32.gmra.mxu0 %v352
      %v377 = vpop.f32.mrf.mxu0
      %v378 = vadd.f32 %v329, %v377
      %379 = vdwg.mxu0
      %380 = vmatpush.msra.mxu0 0.0
      %381 = vmatpush.msra.mxu0 0.0
      %382 = vmatpush.msra.mxu0 0.0
      %383 = vmatpush.msra.mxu0 0.0
      %384 = vmatpush.msra.mxu0 0.0
      %385 = vmatpush.msra.mxu0 0.0
      %386 = vmatpush.msra.mxu0 0.0
      %387 = vmatpush.msra.mxu0 0.0
      %388 = vmatpush.msra.mxu0 0.0
      %389 = vmatpush.msra.mxu0 0.0
      %390 = vmatpush.msra.mxu0 0.0
      %391 = vmatpush.msra.mxu0 0.0
      %392 = vmatpush.msra.mxu0 0.0
      %393 = vmatpush.msra.mxu0 0.0
      %394 = vmatpush.msra.mxu0 0.0
      %395 = vmatpush.msra.mxu0 %v358
      %396 = vmatmul.f32.gmra.mxu0 %v352
      %v397 = vpop.f32.mrf.mxu0
      %v398 = vadd.f32 %v349, %v397
      %399 = vdwg.mxu0
      %400 = vst [vmem:[#allocation1] ss:$2 sm:$0xff] %v252
      %v401 = vld.sshfl [vmem:[#allocation1] sm:$0xff pattern:$0x75316420]
      %v402 = vld.sshfl [vmem:[#allocation1 + $0x8] sm:$0xff pattern:$0x75316420]
      %405 = vrot.lane.b32.xlu0 %v401, 15
      %v406 = vpop.permute.xlu0 %405
      %407 = vrot.lane.b32.xlu0 %v402, 15
      %v408 = vpop.permute.xlu0 %407
      %vm409 = vcmp.lt.s32.totalorder %v264, 15
      %v410 = vsel %vm409, %v406, %v408
      %v411 = vsel %vm409, %v408, %v406
      %s412 = scalar_lea.vmem %s5, 4
      %v413 = vld [vmem:[%s412] sm:$0x3]
      %v415 = vperm.slane %v413, 0
      %v416 = vperm.slane %v413, 1
      %v419 = vmul.f32 %v411, %v415
      %v420 = vmul.f32 %v410, %v416
      %s421 = scalar_lea.vmem %s1, 16
      %v422 = vld [vmem:[%s421] sm:$0xff]
      %v424 = vsel %vm300, %v422, 0
      %v427 = vsel %vm304, %v419, 0
      %v430 = vsel %vm304, %v420, 0
      %432 = vmatpush.msra.mxu0 0.0
      %433 = vmatpush.msra.mxu0 0.0
      %434 = vmatpush.msra.mxu0 0.0
      %435 = vmatpush.msra.mxu0 0.0
      %436 = vmatpush.msra.mxu0 0.0
      %437 = vmatpush.msra.mxu0 0.0
      %438 = vmatpush.msra.mxu0 0.0
      %439 = vmatpush.msra.mxu0 0.0
      %440 = vmatpush.msra.mxu0 0.0
      %441 = vmatpush.msra.mxu0 0.0
      %442 = vmatpush.msra.mxu0 0.0
      %443 = vmatpush.msra.mxu0 0.0
      %444 = vmatpush.msra.mxu0 0.0
      %445 = vmatpush.msra.mxu0 0.0
      %446 = vmatpush.msra.mxu0 0.0
      %447 = vmatpush.msra.mxu0 %v427
      %448 = vmatmul.f32.gmra.mxu0 %v424
      %v449 = vpop.f32.mrf.mxu0
      %v450 = vadd.f32 0.0, %v449
      %451 = vdwg.mxu0
      %452 = vmatpush.msra.mxu0 0.0
      %453 = vmatpush.msra.mxu0 0.0
      %454 = vmatpush.msra.mxu0 0.0
      %455 = vmatpush.msra.mxu0 0.0
      %456 = vmatpush.msra.mxu0 0.0
      %457 = vmatpush.msra.mxu0 0.0
      %458 = vmatpush.msra.mxu0 0.0
      %459 = vmatpush.msra.mxu0 0.0
      %460 = vmatpush.msra.mxu0 0.0
      %461 = vmatpush.msra.mxu0 0.0
      %462 = vmatpush.msra.mxu0 0.0
      %463 = vmatpush.msra.mxu0 0.0
      %464 = vmatpush.msra.mxu0 0.0
      %465 = vmatpush.msra.mxu0 0.0
      %466 = vmatpush.msra.mxu0 0.0
      %467 = vmatpush.msra.mxu0 %v430
      %468 = vmatmul.f32.gmra.mxu0 %v424
      %v469 = vpop.f32.mrf.mxu0
      %v470 = vadd.f32 0.0, %v469
      %471 = vdwg.mxu0
      %v472 = vadd.f32 %v378, %v450
      %v473 = vadd.f32 %v398, %v470
      %474 = vst [vmem:[#allocation1] ss:$2 sm:$0xff] %v252
      %v475 = vld.sshfl [vmem:[#allocation1] sm:$0xff pattern:$0x75316420]
      %v476 = vld.sshfl [vmem:[#allocation1 + $0x8] sm:$0xff pattern:$0x75316420]
      %479 = vrot.lane.b32.xlu0 %v475, 1
      %v480 = vpop.permute.xlu0 %479
      %481 = vrot.lane.b32.xlu0 %v476, 1
      %v482 = vpop.permute.xlu0 %481
      %vm483 = vcmp.lt.s32.totalorder %v264, 1
      %v484 = vsel %vm483, %v480, %v482
      %v485 = vsel %vm483, %v482, %v480
      %s486 = scalar_lea.vmem %s5, 6
      %v487 = vld [vmem:[%s486] sm:$0x3]
      %v489 = vperm.slane %v487, 0
      %v490 = vperm.slane %v487, 1
      %v493 = vmul.f32 %v485, %v489
      %v494 = vmul.f32 %v484, %v490
      %s495 = scalar_lea.vmem %s1, 24
      %v496 = vld [vmem:[%s495] sm:$0xff]
      %v498 = vsel %vm300, %v496, 0
      %v501 = vsel %vm304, %v493, 0
      %v504 = vsel %vm304, %v494, 0
      %506 = vmatpush.msra.mxu0 0.0
      %507 = vmatpush.msra.mxu0 0.0
      %508 = vmatpush.msra.mxu0 0.0
      %509 = vmatpush.msra.mxu0 0.0
      %510 = vmatpush.msra.mxu0 0.0
      %511 = vmatpush.msra.mxu0 0.0
      %512 = vmatpush.msra.mxu0 0.0
      %513 = vmatpush.msra.mxu0 0.0
      %514 = vmatpush.msra.mxu0 0.0
      %515 = vmatpush.msra.mxu0 0.0
      %516 = vmatpush.msra.mxu0 0.0
      %517 = vmatpush.msra.mxu0 0.0
      %518 = vmatpush.msra.mxu0 0.0
      %519 = vmatpush.msra.mxu0 0.0
      %520 = vmatpush.msra.mxu0 0.0
      %521 = vmatpush.msra.mxu0 %v501
      %522 = vmatmul.f32.gmra.mxu0 %v498
      %v523 = vpop.f32.mrf.mxu0
      %v524 = vadd.f32 0.0, %v523
      %525 = vdwg.mxu0
      %526 = vmatpush.msra.mxu0 0.0
      %527 = vmatpush.msra.mxu0 0.0
      %528 = vmatpush.msra.mxu0 0.0
      %529 = vmatpush.msra.mxu0 0.0
      %530 = vmatpush.msra.mxu0 0.0
      %531 = vmatpush.msra.mxu0 0.0
      %532 = vmatpush.msra.mxu0 0.0
      %533 = vmatpush.msra.mxu0 0.0
      %534 = vmatpush.msra.mxu0 0.0
      %535 = vmatpush.msra.mxu0 0.0
      %536 = vmatpush.msra.mxu0 0.0
      %537 = vmatpush.msra.mxu0 0.0
      %538 = vmatpush.msra.mxu0 0.0
      %539 = vmatpush.msra.mxu0 0.0
      %540 = vmatpush.msra.mxu0 0.0
      %541 = vmatpush.msra.mxu0 %v504
      %542 = vmatmul.f32.gmra.mxu0 %v498
      %v543 = vpop.f32.mrf.mxu0
      %v544 = vadd.f32 0.0, %v543
      %545 = vdwg.mxu0
      %v546 = vadd.f32 %v472, %v524
      %v547 = vadd.f32 %v473, %v544
      %s548 = scalar_lea.vmem %s1, 32
      %v549 = vld [vmem:[%s548] sm:$0xff]
      %550 = vst [vmem:[#allocation1] ss:$2 sm:$0xff] %v252
      %v551 = vld.sshfl [vmem:[#allocation1] sm:$0xff pattern:$0x75316420]
      %v552 = vld.sshfl [vmem:[#allocation1 + $0x8] sm:$0xff pattern:$0x75316420]
      %v554 = vsel %vm300, %v549, 0
      %v556 = vsel %vm304, %v551, 0
      %v558 = vsel %vm304, %v552, 0
      %560 = vmatpush.msra.mxu0 0.0
      %561 = vmatpush.msra.mxu0 0.0
      %562 = vmatpush.msra.mxu0 0.0
      %563 = vmatpush.msra.mxu0 0.0
      %564 = vmatpush.msra.mxu0 0.0
      %565 = vmatpush.msra.mxu0 0.0
      %566 = vmatpush.msra.mxu0 0.0
      %567 = vmatpush.msra.mxu0 0.0
      %568 = vmatpush.msra.mxu0 0.0
      %569 = vmatpush.msra.mxu0 0.0
      %570 = vmatpush.msra.mxu0 0.0
      %571 = vmatpush.msra.mxu0 0.0
      %572 = vmatpush.msra.mxu0 0.0
      %573 = vmatpush.msra.mxu0 0.0
      %574 = vmatpush.msra.mxu0 0.0
      %575 = vmatpush.msra.mxu0 %v556
      %576 = vmatmul.f32.gmra.mxu0 %v554
      %v577 = vpop.f32.mrf.mxu0
      %v578 = vadd.f32 0.0, %v577
      %579 = vdwg.mxu0
      %580 = vmatpush.msra.mxu0 0.0
      %581 = vmatpush.msra.mxu0 0.0
      %582 = vmatpush.msra.mxu0 0.0
      %583 = vmatpush.msra.mxu0 0.0
      %584 = vmatpush.msra.mxu0 0.0
      %585 = vmatpush.msra.mxu0 0.0
      %586 = vmatpush.msra.mxu0 0.0
      %587 = vmatpush.msra.mxu0 0.0
      %588 = vmatpush.msra.mxu0 0.0
      %589 = vmatpush.msra.mxu0 0.0
      %590 = vmatpush.msra.mxu0 0.0
      %591 = vmatpush.msra.mxu0 0.0
      %592 = vmatpush.msra.mxu0 0.0
      %593 = vmatpush.msra.mxu0 0.0
      %594 = vmatpush.msra.mxu0 0.0
      %595 = vmatpush.msra.mxu0 %v558
      %596 = vmatmul.f32.gmra.mxu0 %v554
      %v597 = vpop.f32.mrf.mxu0
      %v598 = vadd.f32 0.0, %v597
      %599 = vdwg.mxu0
      %v600 = vadd.f32 %v546, %v578
      %v601 = vadd.f32 %v547, %v598
      %602 = vst [vmem:[#allocation1] ss:$2 sm:$0xff] %v252
      %v603 = vld.sshfl [vmem:[#allocation1] sm:$0xff pattern:$0x75316420]
      %v604 = vld.sshfl [vmem:[#allocation1 + $0x8] sm:$0xff pattern:$0x75316420]
      %607 = vrot.lane.b32.xlu0 %v603, 127
      %v608 = vpop.permute.xlu0 %607
      %609 = vrot.lane.b32.xlu0 %v604, 127
      %v610 = vpop.permute.xlu0 %609
      %vm611 = vcmp.lt.s32.totalorder %v264, 127
      %v612 = vsel %vm611, %v608, %v610
      %v613 = vsel %vm611, %v610, %v608
      %s614 = scalar_lea.vmem %s5, 10
      %v615 = vld [vmem:[%s614] sm:$0x3]
      %v617 = vperm.slane %v615, 0
      %v618 = vperm.slane %v615, 1
      %v621 = vmul.f32 %v612, %v617
      %v622 = vmul.f32 %v613, %v618
      %s623 = scalar_lea.vmem %s1, 40
      %v624 = vld [vmem:[%s623] sm:$0xff]
      %v626 = vsel %vm300, %v624, 0
      %v629 = vsel %vm304, %v621, 0
      %v632 = vsel %vm304, %v622, 0
      %634 = vmatpush.msra.mxu0 0.0
      %635 = vmatpush.msra.mxu0 0.0
      %636 = vmatpush.msra.mxu0 0.0
      %637 = vmatpush.msra.mxu0 0.0
      %638 = vmatpush.msra.mxu0 0.0
      %639 = vmatpush.msra.mxu0 0.0
      %640 = vmatpush.msra.mxu0 0.0
      %641 = vmatpush.msra.mxu0 0.0
      %642 = vmatpush.msra.mxu0 0.0
      %643 = vmatpush.msra.mxu0 0.0
      %644 = vmatpush.msra.mxu0 0.0
      %645 = vmatpush.msra.mxu0 0.0
      %646 = vmatpush.msra.mxu0 0.0
      %647 = vmatpush.msra.mxu0 0.0
      %648 = vmatpush.msra.mxu0 0.0
      %649 = vmatpush.msra.mxu0 %v629
      %650 = vmatmul.f32.gmra.mxu0 %v626
      %v651 = vpop.f32.mrf.mxu0
      %v652 = vadd.f32 0.0, %v651
      %653 = vdwg.mxu0
      %654 = vmatpush.msra.mxu0 0.0
      %655 = vmatpush.msra.mxu0 0.0
      %656 = vmatpush.msra.mxu0 0.0
      %657 = vmatpush.msra.mxu0 0.0
      %658 = vmatpush.msra.mxu0 0.0
      %659 = vmatpush.msra.mxu0 0.0
      %660 = vmatpush.msra.mxu0 0.0
      %661 = vmatpush.msra.mxu0 0.0
      %662 = vmatpush.msra.mxu0 0.0
      %663 = vmatpush.msra.mxu0 0.0
      %664 = vmatpush.msra.mxu0 0.0
      %665 = vmatpush.msra.mxu0 0.0
      %666 = vmatpush.msra.mxu0 0.0
      %667 = vmatpush.msra.mxu0 0.0
      %668 = vmatpush.msra.mxu0 0.0
      %669 = vmatpush.msra.mxu0 %v632
      %670 = vmatmul.f32.gmra.mxu0 %v626
      %v671 = vpop.f32.mrf.mxu0
      %v672 = vadd.f32 0.0, %v671
      %673 = vdwg.mxu0
      %v674 = vadd.f32 %v600, %v652
      %v675 = vadd.f32 %v601, %v672
      %676 = vst [vmem:[#allocation1] ss:$2 sm:$0xff] %v252
      %v677 = vld.sshfl [vmem:[#allocation1] sm:$0xff pattern:$0x75316420]
      %v678 = vld.sshfl [vmem:[#allocation1 + $0x8] sm:$0xff pattern:$0x75316420]
      %681 = vrot.lane.b32.xlu0 %v677, 113
      %v682 = vpop.permute.xlu0 %681
      %683 = vrot.lane.b32.xlu0 %v678, 113
      %v684 = vpop.permute.xlu0 %683
      %vm685 = vcmp.lt.s32.totalorder %v264, 113
      %v686 = vsel %vm685, %v682, %v684
      %v687 = vsel %vm685, %v684, %v682
      %s688 = scalar_lea.vmem %s5, 12
      %v689 = vld [vmem:[%s688] sm:$0x3]
      %v691 = vperm.slane %v689, 0
      %v692 = vperm.slane %v689, 1
      %v695 = vmul.f32 %v686, %v691
      %v696 = vmul.f32 %v687, %v692
      %s697 = scalar_lea.vmem %s1, 48
      %v698 = vld [vmem:[%s697] sm:$0xff]
      %v700 = vsel %vm300, %v698, 0
      %v703 = vsel %vm304, %v695, 0
      %v706 = vsel %vm304, %v696, 0
      %708 = vmatpush.msra.mxu0 0.0
      %709 = vmatpush.msra.mxu0 0.0
      %710 = vmatpush.msra.mxu0 0.0
      %711 = vmatpush.msra.mxu0 0.0
      %712 = vmatpush.msra.mxu0 0.0
      %713 = vmatpush.msra.mxu0 0.0
      %714 = vmatpush.msra.mxu0 0.0
      %715 = vmatpush.msra.mxu0 0.0
      %716 = vmatpush.msra.mxu0 0.0
      %717 = vmatpush.msra.mxu0 0.0
      %718 = vmatpush.msra.mxu0 0.0
      %719 = vmatpush.msra.mxu0 0.0
      %720 = vmatpush.msra.mxu0 0.0
      %721 = vmatpush.msra.mxu0 0.0
      %722 = vmatpush.msra.mxu0 0.0
      %723 = vmatpush.msra.mxu0 %v703
      %724 = vmatmul.f32.gmra.mxu0 %v700
      %v725 = vpop.f32.mrf.mxu0
      %v726 = vadd.f32 0.0, %v725
      %727 = vdwg.mxu0
      %728 = vmatpush.msra.mxu0 0.0
      %729 = vmatpush.msra.mxu0 0.0
      %730 = vmatpush.msra.mxu0 0.0
      %731 = vmatpush.msra.mxu0 0.0
      %732 = vmatpush.msra.mxu0 0.0
      %733 = vmatpush.msra.mxu0 0.0
      %734 = vmatpush.msra.mxu0 0.0
      %735 = vmatpush.msra.mxu0 0.0
      %736 = vmatpush.msra.mxu0 0.0
      %737 = vmatpush.msra.mxu0 0.0
      %738 = vmatpush.msra.mxu0 0.0
      %739 = vmatpush.msra.mxu0 0.0
      %740 = vmatpush.msra.mxu0 0.0
      %741 = vmatpush.msra.mxu0 0.0
      %742 = vmatpush.msra.mxu0 0.0
      %743 = vmatpush.msra.mxu0 %v706
      %744 = vmatmul.f32.gmra.mxu0 %v700
      %v745 = vpop.f32.mrf.mxu0
      %v746 = vadd.f32 0.0, %v745
      %747 = vdwg.mxu0
      %v748 = vadd.f32 %v674, %v726
      %v749 = vadd.f32 %v675, %v746
      %750 = vst [vmem:[#allocation1] ss:$2 sm:$0xff] %v252
      %v751 = vld.sshfl [vmem:[#allocation1] sm:$0xff pattern:$0x75316420]
      %v752 = vld.sshfl [vmem:[#allocation1 + $0x8] sm:$0xff pattern:$0x75316420]
      %755 = vrot.lane.b32.xlu0 %v751, 112
      %v756 = vpop.permute.xlu0 %755
      %757 = vrot.lane.b32.xlu0 %v752, 112
      %v758 = vpop.permute.xlu0 %757
      %vm759 = vcmp.lt.s32.totalorder %v264, 112
      %v760 = vsel %vm759, %v756, %v758
      %v761 = vsel %vm759, %v758, %v756
      %s762 = scalar_lea.vmem %s5, 14
      %v763 = vld [vmem:[%s762] sm:$0x3]
      %v765 = vperm.slane %v763, 0
      %v766 = vperm.slane %v763, 1
      %v769 = vmul.f32 %v760, %v765
      %v770 = vmul.f32 %v761, %v766
      %s771 = scalar_lea.vmem %s1, 56
      %v772 = vld [vmem:[%s771] sm:$0xff]
      %v774 = vsel %vm300, %v772, 0
      %v777 = vsel %vm304, %v769, 0
      %v780 = vsel %vm304, %v770, 0
      %782 = vmatpush.msra.mxu0 0.0
      %783 = vmatpush.msra.mxu0 0.0
      %784 = vmatpush.msra.mxu0 0.0
      %785 = vmatpush.msra.mxu0 0.0
      %786 = vmatpush.msra.mxu0 0.0
      %787 = vmatpush.msra.mxu0 0.0
      %788 = vmatpush.msra.mxu0 0.0
      %789 = vmatpush.msra.mxu0 0.0
      %790 = vmatpush.msra.mxu0 0.0
      %791 = vmatpush.msra.mxu0 0.0
      %792 = vmatpush.msra.mxu0 0.0
      %793 = vmatpush.msra.mxu0 0.0
      %794 = vmatpush.msra.mxu0 0.0
      %795 = vmatpush.msra.mxu0 0.0
      %796 = vmatpush.msra.mxu0 0.0
      %797 = vmatpush.msra.mxu0 %v777
      %798 = vmatmul.f32.gmra.mxu0 %v774
      %v799 = vpop.f32.mrf.mxu0
      %v800 = vadd.f32 0.0, %v799
      %801 = vdwg.mxu0
      %802 = vmatpush.msra.mxu0 0.0
      %803 = vmatpush.msra.mxu0 0.0
      %804 = vmatpush.msra.mxu0 0.0
      %805 = vmatpush.msra.mxu0 0.0
      %806 = vmatpush.msra.mxu0 0.0
      %807 = vmatpush.msra.mxu0 0.0
      %808 = vmatpush.msra.mxu0 0.0
      %809 = vmatpush.msra.mxu0 0.0
      %810 = vmatpush.msra.mxu0 0.0
      %811 = vmatpush.msra.mxu0 0.0
      %812 = vmatpush.msra.mxu0 0.0
      %813 = vmatpush.msra.mxu0 0.0
      %814 = vmatpush.msra.mxu0 0.0
      %815 = vmatpush.msra.mxu0 0.0
      %816 = vmatpush.msra.mxu0 0.0
      %817 = vmatpush.msra.mxu0 %v780
      %818 = vmatmul.f32.gmra.mxu0 %v774
      %v819 = vpop.f32.mrf.mxu0
      %v820 = vadd.f32 0.0, %v819
      %821 = vdwg.mxu0
      %v822 = vadd.f32 %v748, %v800
      %v823 = vadd.f32 %v749, %v820
      %824 = vst [vmem:[#allocation1] ss:$2 sm:$0xff] %v252
      %v825 = vld.sshfl [vmem:[#allocation1] sm:$0xff pattern:$0x75316420]
      %v826 = vld.sshfl [vmem:[#allocation1 + $0x8] sm:$0xff pattern:$0x75316420]
      %829 = vrot.lane.b32.xlu0 %v825, 111
      %v830 = vpop.permute.xlu0 %829
      %831 = vrot.lane.b32.xlu0 %v826, 111
      %v832 = vpop.permute.xlu0 %831
      %vm833 = vcmp.lt.s32.totalorder %v264, 111
      %v834 = vsel %vm833, %v830, %v832
      %v835 = vsel %vm833, %v832, %v830
      %s836 = scalar_lea.vmem %s5, 16
      %v837 = vld [vmem:[%s836] sm:$0x3]
      %v839 = vperm.slane %v837, 0
      %v840 = vperm.slane %v837, 1
      %v843 = vmul.f32 %v834, %v839
      %v844 = vmul.f32 %v835, %v840
      %s845 = scalar_lea.vmem %s1, 64
      %v846 = vld [vmem:[%s845] sm:$0xff]
      %v848 = vsel %vm300, %v846, 0
      %v851 = vsel %vm304, %v843, 0
      %v854 = vsel %vm304, %v844, 0
      %856 = vmatpush.msra.mxu0 0.0
      %857 = vmatpush.msra.mxu0 0.0
      %858 = vmatpush.msra.mxu0 0.0
      %859 = vmatpush.msra.mxu0 0.0
      %860 = vmatpush.msra.mxu0 0.0
      %861 = vmatpush.msra.mxu0 0.0
      %862 = vmatpush.msra.mxu0 0.0
      %863 = vmatpush.msra.mxu0 0.0
      %864 = vmatpush.msra.mxu0 0.0
      %865 = vmatpush.msra.mxu0 0.0
      %866 = vmatpush.msra.mxu0 0.0
      %867 = vmatpush.msra.mxu0 0.0
      %868 = vmatpush.msra.mxu0 0.0
      %869 = vmatpush.msra.mxu0 0.0
      %870 = vmatpush.msra.mxu0 0.0
      %871 = vmatpush.msra.mxu0 %v851
      %872 = vmatmul.f32.gmra.mxu0 %v848
      %v873 = vpop.f32.mrf.mxu0
      %v874 = vadd.f32 0.0, %v873
      %875 = vdwg.mxu0
      %876 = vmatpush.msra.mxu0 0.0
      %877 = vmatpush.msra.mxu0 0.0
      %878 = vmatpush.msra.mxu0 0.0
      %879 = vmatpush.msra.mxu0 0.0
      %880 = vmatpush.msra.mxu0 0.0
      %881 = vmatpush.msra.mxu0 0.0
      %882 = vmatpush.msra.mxu0 0.0
      %883 = vmatpush.msra.mxu0 0.0
      %884 = vmatpush.msra.mxu0 0.0
      %885 = vmatpush.msra.mxu0 0.0
      %886 = vmatpush.msra.mxu0 0.0
      %887 = vmatpush.msra.mxu0 0.0
      %888 = vmatpush.msra.mxu0 0.0
      %889 = vmatpush.msra.mxu0 0.0
      %890 = vmatpush.msra.mxu0 0.0
      %891 = vmatpush.msra.mxu0 %v854
      %892 = vmatmul.f32.gmra.mxu0 %v848
      %v893 = vpop.f32.mrf.mxu0
      %v894 = vadd.f32 0.0, %v893
      %895 = vdwg.mxu0
      %v896 = vadd.f32 %v822, %v874
      %v897 = vadd.f32 %v823, %v894
      %v898 = vld [vmem:[%s2] sm:$0xff]
      %900 = vset.pattern.permute.xlu0 0
      %901 = vperm.xlu0 %900, %v898
      %v902 = vpop.permute.xlu0 %901
      %v904 = vadd.f32 %v896, %v902
      %v905 = vadd.f32 %v897, %v902
      %v906 = vmax.f32 %v904, 0.0
      %v907 = vmax.f32 %v905, 0.0
      %908 = vrot.lane.b32.xlu0 %v906, 17
      %v909 = vpop.permute.xlu0 %908
      %910 = vrot.lane.b32.xlu0 %v907, 17
      %v911 = vpop.permute.xlu0 %910
      %v912 = vsel %vm265, %v909, %v911
      %v913 = vsel %vm265, %v911, %v909
      %v914 = vmul.f32 %v913, %v270
      %v915 = vmul.f32 %v912, %v271
      %v916 = vld [vmem:[%s3] sm:$0xff]
      %917 = vrot.lane.b32.xlu0 %v906, 16
      %v918 = vpop.permute.xlu0 %917
      %919 = vrot.lane.b32.xlu0 %v907, 16
      %v920 = vpop.permute.xlu0 %919
      %v921 = vsel %vm286, %v918, %v920
      %v922 = vsel %vm286, %v920, %v918
      %v923 = vmul.f32 %v922, %v292
      %v924 = vmul.f32 %v921, %v293
      %s925 = scalar_lea.vmem %s3, 8
      %v926 = vld [vmem:[%s925] sm:$0xff]
      %vm927 = vcmask 64512
      %v929 = vsel %vm927, %v926, 0
      %931 = vmatpush.msra.mxu0 0.0
      %932 = vmatpush.msra.mxu0 0.0
      %933 = vmatpush.msra.mxu0 0.0
      %934 = vmatpush.msra.mxu0 0.0
      %935 = vmatpush.msra.mxu0 0.0
      %936 = vmatpush.msra.mxu0 0.0
      %937 = vmatpush.msra.mxu0 0.0
      %938 = vmatpush.msra.mxu0 0.0
      %939 = vmatpush.msra.mxu0 0.0
      %940 = vmatpush.msra.mxu0 0.0
      %941 = vmatpush.msra.mxu0 0.0
      %942 = vmatpush.msra.mxu0 0.0
      %943 = vmatpush.msra.mxu0 0.0
      %944 = vmatpush.msra.mxu0 0.0
      %945 = vmatpush.msra.mxu0 0.0
      %946 = vmatpush.msra.mxu0 %v923
      %947 = vmatmul.f32.gmra.mxu0 %v929
      %v948 = vpop.f32.mrf.mxu0
      %v949 = vadd.f32 0.0, %v948
      %950 = vdwg.mxu0
      %951 = vmatpush.msra.mxu0 0.0
      %952 = vmatpush.msra.mxu0 0.0
      %953 = vmatpush.msra.mxu0 0.0
      %954 = vmatpush.msra.mxu0 0.0
      %955 = vmatpush.msra.mxu0 0.0
      %956 = vmatpush.msra.mxu0 0.0
      %957 = vmatpush.msra.mxu0 0.0
      %958 = vmatpush.msra.mxu0 0.0
      %959 = vmatpush.msra.mxu0 0.0
      %960 = vmatpush.msra.mxu0 0.0
      %961 = vmatpush.msra.mxu0 0.0
      %962 = vmatpush.msra.mxu0 0.0
      %963 = vmatpush.msra.mxu0 0.0
      %964 = vmatpush.msra.mxu0 0.0
      %965 = vmatpush.msra.mxu0 0.0
      %966 = vmatpush.msra.mxu0 %v924
      %967 = vmatmul.f32.gmra.mxu0 %v929
      %v968 = vpop.f32.mrf.mxu0
      %v969 = vadd.f32 0.0, %v968
      %970 = vdwg.mxu0
      %v972 = vsel %vm927, %v916, 0
      %974 = vmatpush.msra.mxu0 0.0
      %975 = vmatpush.msra.mxu0 0.0
      %976 = vmatpush.msra.mxu0 0.0
      %977 = vmatpush.msra.mxu0 0.0
      %978 = vmatpush.msra.mxu0 0.0
      %979 = vmatpush.msra.mxu0 0.0
      %980 = vmatpush.msra.mxu0 0.0
      %981 = vmatpush.msra.mxu0 0.0
      %982 = vmatpush.msra.mxu0 0.0
      %983 = vmatpush.msra.mxu0 0.0
      %984 = vmatpush.msra.mxu0 0.0
      %985 = vmatpush.msra.mxu0 0.0
      %986 = vmatpush.msra.mxu0 0.0
      %987 = vmatpush.msra.mxu0 0.0
      %988 = vmatpush.msra.mxu0 0.0
      %989 = vmatpush.msra.mxu0 %v914
      %990 = vmatmul.f32.gmra.mxu0 %v972
      %v991 = vpop.f32.mrf.mxu0
      %v992 = vadd.f32 %v949, %v991
      %993 = vdwg.mxu0
      %994 = vmatpush.msra.mxu0 0.0
      %995 = vmatpush.msra.mxu0 0.0
      %996 = vmatpush.msra.mxu0 0.0
      %997 = vmatpush.msra.mxu0 0.0
      %998 = vmatpush.msra.mxu0 0.0
      %999 = vmatpush.msra.mxu0 0.0
      %1000 = vmatpush.msra.mxu0 0.0
      %1001 = vmatpush.msra.mxu0 0.0
      %1002 = vmatpush.msra.mxu0 0.0
      %1003 = vmatpush.msra.mxu0 0.0
      %1004 = vmatpush.msra.mxu0 0.0
      %1005 = vmatpush.msra.mxu0 0.0
      %1006 = vmatpush.msra.mxu0 0.0
      %1007 = vmatpush.msra.mxu0 0.0
      %1008 = vmatpush.msra.mxu0 0.0
      %1009 = vmatpush.msra.mxu0 %v915
      %1010 = vmatmul.f32.gmra.mxu0 %v972
      %v1011 = vpop.f32.mrf.mxu0
      %v1012 = vadd.f32 %v969, %v1011
      %1013 = vdwg.mxu0
      %1014 = vrot.lane.b32.xlu0 %v906, 15
      %v1015 = vpop.permute.xlu0 %1014
      %1016 = vrot.lane.b32.xlu0 %v907, 15
      %v1017 = vpop.permute.xlu0 %1016
      %v1018 = vsel %vm409, %v1015, %v1017
      %v1019 = vsel %vm409, %v1017, %v1015
      %v1020 = vmul.f32 %v1019, %v415
      %v1021 = vmul.f32 %v1018, %v416
      %s1022 = scalar_lea.vmem %s3, 16
      %v1023 = vld [vmem:[%s1022] sm:$0xff]
      %v1025 = vsel %vm927, %v1023, 0
      %1027 = vmatpush.msra.mxu0 0.0
      %1028 = vmatpush.msra.mxu0 0.0
      %1029 = vmatpush.msra.mxu0 0.0
      %1030 = vmatpush.msra.mxu0 0.0
      %1031 = vmatpush.msra.mxu0 0.0
      %1032 = vmatpush.msra.mxu0 0.0
      %1033 = vmatpush.msra.mxu0 0.0
      %1034 = vmatpush.msra.mxu0 0.0
      %1035 = vmatpush.msra.mxu0 0.0
      %1036 = vmatpush.msra.mxu0 0.0
      %1037 = vmatpush.msra.mxu0 0.0
      %1038 = vmatpush.msra.mxu0 0.0
      %1039 = vmatpush.msra.mxu0 0.0
      %1040 = vmatpush.msra.mxu0 0.0
      %1041 = vmatpush.msra.mxu0 0.0
      %1042 = vmatpush.msra.mxu0 %v1020
      %1043 = vmatmul.f32.gmra.mxu0 %v1025
      %v1044 = vpop.f32.mrf.mxu0
      %v1045 = vadd.f32 0.0, %v1044
      %1046 = vdwg.mxu0
      %1047 = vmatpush.msra.mxu0 0.0
      %1048 = vmatpush.msra.mxu0 0.0
      %1049 = vmatpush.msra.mxu0 0.0
      %1050 = vmatpush.msra.mxu0 0.0
      %1051 = vmatpush.msra.mxu0 0.0
      %1052 = vmatpush.msra.mxu0 0.0
      %1053 = vmatpush.msra.mxu0 0.0
      %1054 = vmatpush.msra.mxu0 0.0
      %1055 = vmatpush.msra.mxu0 0.0
      %1056 = vmatpush.msra.mxu0 0.0
      %1057 = vmatpush.msra.mxu0 0.0
      %1058 = vmatpush.msra.mxu0 0.0
      %1059 = vmatpush.msra.mxu0 0.0
      %1060 = vmatpush.msra.mxu0 0.0
      %1061 = vmatpush.msra.mxu0 0.0
      %1062 = vmatpush.msra.mxu0 %v1021
      %1063 = vmatmul.f32.gmra.mxu0 %v1025
      %v1064 = vpop.f32.mrf.mxu0
      %v1065 = vadd.f32 0.0, %v1064
      %1066 = vdwg.mxu0
      %v1067 = vadd.f32 %v992, %v1045
      %v1068 = vadd.f32 %v1012, %v1065
      %1069 = vrot.lane.b32.xlu0 %v906, 1
      %v1070 = vpop.permute.xlu0 %1069
      %1071 = vrot.lane.b32.xlu0 %v907, 1
      %v1072 = vpop.permute.xlu0 %1071
      %v1073 = vsel %vm483, %v1070, %v1072
      %v1074 = vsel %vm483, %v1072, %v1070
      %v1075 = vmul.f32 %v1074, %v489
      %v1076 = vmul.f32 %v1073, %v490
      %s1077 = scalar_lea.vmem %s3, 24
      %v1078 = vld [vmem:[%s1077] sm:$0xff]
      %v1080 = vsel %vm927, %v1078, 0
      %1082 = vmatpush.msra.mxu0 0.0
      %1083 = vmatpush.msra.mxu0 0.0
      %1084 = vmatpush.msra.mxu0 0.0
      %1085 = vmatpush.msra.mxu0 0.0
      %1086 = vmatpush.msra.mxu0 0.0
      %1087 = vmatpush.msra.mxu0 0.0
      %1088 = vmatpush.msra.mxu0 0.0
      %1089 = vmatpush.msra.mxu0 0.0
      %1090 = vmatpush.msra.mxu0 0.0
      %1091 = vmatpush.msra.mxu0 0.0
      %1092 = vmatpush.msra.mxu0 0.0
      %1093 = vmatpush.msra.mxu0 0.0
      %1094 = vmatpush.msra.mxu0 0.0
      %1095 = vmatpush.msra.mxu0 0.0
      %1096 = vmatpush.msra.mxu0 0.0
      %1097 = vmatpush.msra.mxu0 %v1075
      %1098 = vmatmul.f32.gmra.mxu0 %v1080
      %v1099 = vpop.f32.mrf.mxu0
      %v1100 = vadd.f32 0.0, %v1099
      %1101 = vdwg.mxu0
      %1102 = vmatpush.msra.mxu0 0.0
      %1103 = vmatpush.msra.mxu0 0.0
      %1104 = vmatpush.msra.mxu0 0.0
      %1105 = vmatpush.msra.mxu0 0.0
      %1106 = vmatpush.msra.mxu0 0.0
      %1107 = vmatpush.msra.mxu0 0.0
      %1108 = vmatpush.msra.mxu0 0.0
      %1109 = vmatpush.msra.mxu0 0.0
      %1110 = vmatpush.msra.mxu0 0.0
      %1111 = vmatpush.msra.mxu0 0.0
      %1112 = vmatpush.msra.mxu0 0.0
      %1113 = vmatpush.msra.mxu0 0.0
      %1114 = vmatpush.msra.mxu0 0.0
      %1115 = vmatpush.msra.mxu0 0.0
      %1116 = vmatpush.msra.mxu0 0.0
      %1117 = vmatpush.msra.mxu0 %v1076
      %1118 = vmatmul.f32.gmra.mxu0 %v1080
      %v1119 = vpop.f32.mrf.mxu0
      %v1120 = vadd.f32 0.0, %v1119
      %1121 = vdwg.mxu0
      %v1122 = vadd.f32 %v1067, %v1100
      %v1123 = vadd.f32 %v1068, %v1120
      %s1124 = scalar_lea.vmem %s3, 32
      %v1125 = vld [vmem:[%s1124] sm:$0xff]
      %v1127 = vsel %vm927, %v1125, 0
      %1129 = vmatpush.msra.mxu0 0.0
      %1130 = vmatpush.msra.mxu0 0.0
      %1131 = vmatpush.msra.mxu0 0.0
      %1132 = vmatpush.msra.mxu0 0.0
      %1133 = vmatpush.msra.mxu0 0.0
      %1134 = vmatpush.msra.mxu0 0.0
      %1135 = vmatpush.msra.mxu0 0.0
      %1136 = vmatpush.msra.mxu0 0.0
      %1137 = vmatpush.msra.mxu0 0.0
      %1138 = vmatpush.msra.mxu0 0.0
      %1139 = vmatpush.msra.mxu0 0.0
      %1140 = vmatpush.msra.mxu0 0.0
      %1141 = vmatpush.msra.mxu0 0.0
      %1142 = vmatpush.msra.mxu0 0.0
      %1143 = vmatpush.msra.mxu0 0.0
      %1144 = vmatpush.msra.mxu0 %v906
      %1145 = vmatmul.f32.gmra.mxu0 %v1127
      %v1146 = vpop.f32.mrf.mxu0
      %v1147 = vadd.f32 0.0, %v1146
      %1148 = vdwg.mxu0
      %1149 = vmatpush.msra.mxu0 0.0
      %1150 = vmatpush.msra.mxu0 0.0
      %1151 = vmatpush.msra.mxu0 0.0
      %1152 = vmatpush.msra.mxu0 0.0
      %1153 = vmatpush.msra.mxu0 0.0
      %1154 = vmatpush.msra.mxu0 0.0
      %1155 = vmatpush.msra.mxu0 0.0
      %1156 = vmatpush.msra.mxu0 0.0
      %1157 = vmatpush.msra.mxu0 0.0
      %1158 = vmatpush.msra.mxu0 0.0
      %1159 = vmatpush.msra.mxu0 0.0
      %1160 = vmatpush.msra.mxu0 0.0
      %1161 = vmatpush.msra.mxu0 0.0
      %1162 = vmatpush.msra.mxu0 0.0
      %1163 = vmatpush.msra.mxu0 0.0
      %1164 = vmatpush.msra.mxu0 %v907
      %1165 = vmatmul.f32.gmra.mxu0 %v1127
      %v1166 = vpop.f32.mrf.mxu0
      %v1167 = vadd.f32 0.0, %v1166
      %1168 = vdwg.mxu0
      %v1169 = vadd.f32 %v1122, %v1147
      %v1170 = vadd.f32 %v1123, %v1167
      %1171 = vrot.lane.b32.xlu0 %v906, 127
      %v1172 = vpop.permute.xlu0 %1171
      %1173 = vrot.lane.b32.xlu0 %v907, 127
      %v1174 = vpop.permute.xlu0 %1173
      %v1175 = vsel %vm611, %v1172, %v1174
      %v1176 = vsel %vm611, %v1174, %v1172
      %v1177 = vmul.f32 %v1175, %v617
      %v1178 = vmul.f32 %v1176, %v618
      %s1179 = scalar_lea.vmem %s3, 40
      %v1180 = vld [vmem:[%s1179] sm:$0xff]
      %v1182 = vsel %vm927, %v1180, 0
      %1184 = vmatpush.msra.mxu0 0.0
      %1185 = vmatpush.msra.mxu0 0.0
      %1186 = vmatpush.msra.mxu0 0.0
      %1187 = vmatpush.msra.mxu0 0.0
      %1188 = vmatpush.msra.mxu0 0.0
      %1189 = vmatpush.msra.mxu0 0.0
      %1190 = vmatpush.msra.mxu0 0.0
      %1191 = vmatpush.msra.mxu0 0.0
      %1192 = vmatpush.msra.mxu0 0.0
      %1193 = vmatpush.msra.mxu0 0.0
      %1194 = vmatpush.msra.mxu0 0.0
      %1195 = vmatpush.msra.mxu0 0.0
      %1196 = vmatpush.msra.mxu0 0.0
      %1197 = vmatpush.msra.mxu0 0.0
      %1198 = vmatpush.msra.mxu0 0.0
      %1199 = vmatpush.msra.mxu0 %v1177
      %1200 = vmatmul.f32.gmra.mxu0 %v1182
      %v1201 = vpop.f32.mrf.mxu0
      %v1202 = vadd.f32 0.0, %v1201
      %1203 = vdwg.mxu0
      %1204 = vmatpush.msra.mxu0 0.0
      %1205 = vmatpush.msra.mxu0 0.0
      %1206 = vmatpush.msra.mxu0 0.0
      %1207 = vmatpush.msra.mxu0 0.0
      %1208 = vmatpush.msra.mxu0 0.0
      %1209 = vmatpush.msra.mxu0 0.0
      %1210 = vmatpush.msra.mxu0 0.0
      %1211 = vmatpush.msra.mxu0 0.0
      %1212 = vmatpush.msra.mxu0 0.0
      %1213 = vmatpush.msra.mxu0 0.0
      %1214 = vmatpush.msra.mxu0 0.0
      %1215 = vmatpush.msra.mxu0 0.0
      %1216 = vmatpush.msra.mxu0 0.0
      %1217 = vmatpush.msra.mxu0 0.0
      %1218 = vmatpush.msra.mxu0 0.0
      %1219 = vmatpush.msra.mxu0 %v1178
      %1220 = vmatmul.f32.gmra.mxu0 %v1182
      %v1221 = vpop.f32.mrf.mxu0
      %v1222 = vadd.f32 0.0, %v1221
      %1223 = vdwg.mxu0
      %v1224 = vadd.f32 %v1169, %v1202
      %v1225 = vadd.f32 %v1170, %v1222
      %1226 = vrot.lane.b32.xlu0 %v906, 113
      %v1227 = vpop.permute.xlu0 %1226
      %1228 = vrot.lane.b32.xlu0 %v907, 113
      %v1229 = vpop.permute.xlu0 %1228
      %v1230 = vsel %vm685, %v1227, %v1229
      %v1231 = vsel %vm685, %v1229, %v1227
      %v1232 = vmul.f32 %v1230, %v691
      %v1233 = vmul.f32 %v1231, %v692
      %s1234 = scalar_lea.vmem %s3, 48
      %v1235 = vld [vmem:[%s1234] sm:$0xff]
      %v1237 = vsel %vm927, %v1235, 0
      %1239 = vmatpush.msra.mxu0 0.0
      %1240 = vmatpush.msra.mxu0 0.0
      %1241 = vmatpush.msra.mxu0 0.0
      %1242 = vmatpush.msra.mxu0 0.0
      %1243 = vmatpush.msra.mxu0 0.0
      %1244 = vmatpush.msra.mxu0 0.0
      %1245 = vmatpush.msra.mxu0 0.0
      %1246 = vmatpush.msra.mxu0 0.0
      %1247 = vmatpush.msra.mxu0 0.0
      %1248 = vmatpush.msra.mxu0 0.0
      %1249 = vmatpush.msra.mxu0 0.0
      %1250 = vmatpush.msra.mxu0 0.0
      %1251 = vmatpush.msra.mxu0 0.0
      %1252 = vmatpush.msra.mxu0 0.0
      %1253 = vmatpush.msra.mxu0 0.0
      %1254 = vmatpush.msra.mxu0 %v1232
      %1255 = vmatmul.f32.gmra.mxu0 %v1237
      %v1256 = vpop.f32.mrf.mxu0
      %v1257 = vadd.f32 0.0, %v1256
      %1258 = vdwg.mxu0
      %1259 = vmatpush.msra.mxu0 0.0
      %1260 = vmatpush.msra.mxu0 0.0
      %1261 = vmatpush.msra.mxu0 0.0
      %1262 = vmatpush.msra.mxu0 0.0
      %1263 = vmatpush.msra.mxu0 0.0
      %1264 = vmatpush.msra.mxu0 0.0
      %1265 = vmatpush.msra.mxu0 0.0
      %1266 = vmatpush.msra.mxu0 0.0
      %1267 = vmatpush.msra.mxu0 0.0
      %1268 = vmatpush.msra.mxu0 0.0
      %1269 = vmatpush.msra.mxu0 0.0
      %1270 = vmatpush.msra.mxu0 0.0
      %1271 = vmatpush.msra.mxu0 0.0
      %1272 = vmatpush.msra.mxu0 0.0
      %1273 = vmatpush.msra.mxu0 0.0
      %1274 = vmatpush.msra.mxu0 %v1233
      %1275 = vmatmul.f32.gmra.mxu0 %v1237
      %v1276 = vpop.f32.mrf.mxu0
      %v1277 = vadd.f32 0.0, %v1276
      %1278 = vdwg.mxu0
      %v1279 = vadd.f32 %v1224, %v1257
      %v1280 = vadd.f32 %v1225, %v1277
      %1281 = vrot.lane.b32.xlu0 %v906, 112
      %v1282 = vpop.permute.xlu0 %1281
      %1283 = vrot.lane.b32.xlu0 %v907, 112
      %v1284 = vpop.permute.xlu0 %1283
      %v1285 = vsel %vm759, %v1282, %v1284
      %v1286 = vsel %vm759, %v1284, %v1282
      %v1287 = vmul.f32 %v1285, %v765
      %v1288 = vmul.f32 %v1286, %v766
      %s1289 = scalar_lea.vmem %s3, 56
      %v1290 = vld [vmem:[%s1289] sm:$0xff]
      %v1292 = vsel %vm927, %v1290, 0
      %1294 = vmatpush.msra.mxu0 0.0
      %1295 = vmatpush.msra.mxu0 0.0
      %1296 = vmatpush.msra.mxu0 0.0
      %1297 = vmatpush.msra.mxu0 0.0
      %1298 = vmatpush.msra.mxu0 0.0
      %1299 = vmatpush.msra.mxu0 0.0
      %1300 = vmatpush.msra.mxu0 0.0
      %1301 = vmatpush.msra.mxu0 0.0
      %1302 = vmatpush.msra.mxu0 0.0
      %1303 = vmatpush.msra.mxu0 0.0
      %1304 = vmatpush.msra.mxu0 0.0
      %1305 = vmatpush.msra.mxu0 0.0
      %1306 = vmatpush.msra.mxu0 0.0
      %1307 = vmatpush.msra.mxu0 0.0
      %1308 = vmatpush.msra.mxu0 0.0
      %1309 = vmatpush.msra.mxu0 %v1287
      %1310 = vmatmul.f32.gmra.mxu0 %v1292
      %v1311 = vpop.f32.mrf.mxu0
      %v1312 = vadd.f32 0.0, %v1311
      %1313 = vdwg.mxu0
      %1314 = vmatpush.msra.mxu0 0.0
      %1315 = vmatpush.msra.mxu0 0.0
      %1316 = vmatpush.msra.mxu0 0.0
      %1317 = vmatpush.msra.mxu0 0.0
      %1318 = vmatpush.msra.mxu0 0.0
      %1319 = vmatpush.msra.mxu0 0.0
      %1320 = vmatpush.msra.mxu0 0.0
      %1321 = vmatpush.msra.mxu0 0.0
      %1322 = vmatpush.msra.mxu0 0.0
      %1323 = vmatpush.msra.mxu0 0.0
      %1324 = vmatpush.msra.mxu0 0.0
      %1325 = vmatpush.msra.mxu0 0.0
      %1326 = vmatpush.msra.mxu0 0.0
      %1327 = vmatpush.msra.mxu0 0.0
      %1328 = vmatpush.msra.mxu0 0.0
      %1329 = vmatpush.msra.mxu0 %v1288
      %1330 = vmatmul.f32.gmra.mxu0 %v1292
      %v1331 = vpop.f32.mrf.mxu0
      %v1332 = vadd.f32 0.0, %v1331
      %1333 = vdwg.mxu0
      %v1334 = vadd.f32 %v1279, %v1312
      %v1335 = vadd.f32 %v1280, %v1332
      %1336 = vrot.lane.b32.xlu0 %v906, 111
      %v1337 = vpop.permute.xlu0 %1336
      %1338 = vrot.lane.b32.xlu0 %v907, 111
      %v1339 = vpop.permute.xlu0 %1338
      %v1340 = vsel %vm833, %v1337, %v1339
      %v1341 = vsel %vm833, %v1339, %v1337
      %v1342 = vmul.f32 %v1340, %v839
      %v1343 = vmul.f32 %v1341, %v840
      %s1344 = scalar_lea.vmem %s3, 64
      %v1345 = vld [vmem:[%s1344] sm:$0xff]
      %v1347 = vsel %vm927, %v1345, 0
      %1349 = vmatpush.msra.mxu0 0.0
      %1350 = vmatpush.msra.mxu0 0.0
      %1351 = vmatpush.msra.mxu0 0.0
      %1352 = vmatpush.msra.mxu0 0.0
      %1353 = vmatpush.msra.mxu0 0.0
      %1354 = vmatpush.msra.mxu0 0.0
      %1355 = vmatpush.msra.mxu0 0.0
      %1356 = vmatpush.msra.mxu0 0.0
      %1357 = vmatpush.msra.mxu0 0.0
      %1358 = vmatpush.msra.mxu0 0.0
      %1359 = vmatpush.msra.mxu0 0.0
      %1360 = vmatpush.msra.mxu0 0.0
      %1361 = vmatpush.msra.mxu0 0.0
      %1362 = vmatpush.msra.mxu0 0.0
      %1363 = vmatpush.msra.mxu0 0.0
      %1364 = vmatpush.msra.mxu0 %v1342
      %1365 = vmatmul.f32.gmra.mxu0 %v1347
      %v1366 = vpop.f32.mrf.mxu0
      %v1367 = vadd.f32 0.0, %v1366
      %1368 = vdwg.mxu0
      %1369 = vmatpush.msra.mxu0 0.0
      %1370 = vmatpush.msra.mxu0 0.0
      %1371 = vmatpush.msra.mxu0 0.0
      %1372 = vmatpush.msra.mxu0 0.0
      %1373 = vmatpush.msra.mxu0 0.0
      %1374 = vmatpush.msra.mxu0 0.0
      %1375 = vmatpush.msra.mxu0 0.0
      %1376 = vmatpush.msra.mxu0 0.0
      %1377 = vmatpush.msra.mxu0 0.0
      %1378 = vmatpush.msra.mxu0 0.0
      %1379 = vmatpush.msra.mxu0 0.0
      %1380 = vmatpush.msra.mxu0 0.0
      %1381 = vmatpush.msra.mxu0 0.0
      %1382 = vmatpush.msra.mxu0 0.0
      %1383 = vmatpush.msra.mxu0 0.0
      %1384 = vmatpush.msra.mxu0 %v1343
      %1385 = vmatmul.f32.gmra.mxu0 %v1347
      %v1386 = vpop.f32.mrf.mxu0
      %v1387 = vadd.f32 0.0, %v1386
      %1388 = vdwg.mxu0
      %v1389 = vadd.f32 %v1334, %v1367
      %v1390 = vadd.f32 %v1335, %v1387
      %v1391 = vld [vmem:[%s4] sm:$0xff]
      %1393 = vset.pattern.permute.xlu0 0
      %1394 = vperm.xlu0 %1393, %v1391
      %v1395 = vpop.permute.xlu0 %1394
      %v1397 = vadd.f32 %v1389, %v1395
      %v1398 = vadd.f32 %v1390, %v1395
      %v1399 = vmax.f32 %v1397, 0.0
      %v1400 = vmax.f32 %v1398, 0.0
      %1401 = vst [vmem:[%s251] sm:$0xff] %v1399
      %1402 = vst [vmem:[%s251 + $0x8] sm:$0xff] %v1400
      %p1403 = scmp.lt.s32.totalorder %s17, 1
      %s1404 = scalar_select %p1403, %s17, 1
      %s1405 = smul.addr %s1404, 2
      %s1406 = smul.addr %s1405, 8
      %s1407 = scalar_lea.vmem %s6, %s1406
      // Predicated region
      $region45: #{conv_no_pool.1} parent=43 // pred_check
        %p1408 = pneg %p166
      $region46: #{conv_no_pool.1} parent=43 // pred_check_branch
        %1410 = sbr.rel (%p1408) target = $region48
      $region47: #{conv_no_pool.1} parent=43 // pred_region
        _
      $region48: #{conv_no_pool.1} parent=43 // pred_fallthru
        _
    $region44: #{conv_no_pool.1} parent=5 // pred_fallthru
      _
    %p1411 = scmp.le.s32.totalorder 2, %s12
    // Predicated region
    $region49: #{conv_no_pool.1} parent=5 // pred_check
      %p1412 = pneg %p1411
    $region50: #{conv_no_pool.1} parent=5 // pred_check_branch
      %1414 = sbr.rel (%p1412) target = $region52
    $region51: #{conv_no_pool.1} parent=5 // pred_region
      %s1415 = ssub.s32 %s12, 2
      // Predicated region
      $region53: #{conv_no_pool.1} parent=51 // pred_check
        %p1416 = pneg %p172
      $region54: #{conv_no_pool.1} parent=51 // pred_check_branch
        %1418 = sbr.rel (%p1416) target = $region56
      $region55: #{conv_no_pool.1} parent=51 // pred_region
        %p1419 = scmp.lt.s32.totalorder %s18, 1
        %s1420 = scalar_select %p1419, %s18, 1
        %s1421 = smul.addr %s1420, 2
        %s1422 = smul.addr %s1421, 8
        %s1423 = scalar_lea.vmem %s6, %s1422
      $region56: #{conv_no_pool.1} parent=51 // pred_fallthru
        _
    $region52: #{conv_no_pool.1} parent=5 // pred_fallthru
      _
  $region6: #{conv_no_pool.1} parent=0 // loop_footer
    %s16 = sadd.s32 1, %s12
  $region7: #{conv_no_pool.1} parent=0 // loop_footer_branch
    %11 = sbr.rel target = $region3
  $region8: #{conv_no_pool.1} parent=0 // loop_exit
    _

</llo_original>
